<compile_context>
chip_gen: v5e
topology: v5e:2x2
jax: 0.10.0
libtpu: 0.0.40
codegen_flags: <defaults>
</compile_context>

<pallas_src>
import functools

import jax
import jax.numpy as jnp
from jax.experimental import pallas as pl
from jax.experimental.pallas import tpu as pltpu

# ---------------- configuration ----------------
X_BOUND = (-8.0, 8.0, 1.0)
Y_BOUND = (-8.0, 8.0, 1.0)
Z_BOUND = (-10.0, 10.0, 20.0)
D_BOUND = (2.0, 10.0, 1.0)
IMG_H, IMG_W = 64, 64
DOWNSAMPLE = 8
ENC_IN_C_PAD = 8          # RGB (3) zero-padded to 8 for clean sublane layout
ENC_HIDDEN = 32
ENC_OUT_C = 16            # cfg.MODEL.ENCODER.OUT_CHANNELS
RECEPTIVE_FIELD = 1       # cfg.TIME_RECEPTIVE_FIELD
N_FUTURE = 0              # cfg.N_FUTURE_FRAMES
BACKBONE_C = 32
NECK_C = 32
N_CLS = 2
N_REG = 8
HEAD_ROWS = 16            # head channels (10) padded to a sublane multiple

BEV_X = int(round((X_BOUND[1] - X_BOUND[0]) / X_BOUND[2]))   # 16
BEV_Y = int(round((Y_BOUND[1] - Y_BOUND[0]) / Y_BOUND[2]))   # 16
BEV_Z = int(round((Z_BOUND[1] - Z_BOUND[0]) / Z_BOUND[2]))   # 1
FEAT_H, FEAT_W = IMG_H // DOWNSAMPLE, IMG_W // DOWNSAMPLE    # 8, 8
DEPTH_CH = int(round((D_BOUND[1] - D_BOUND[0]) / D_BOUND[2]))  # 8
VB = BEV_X * BEV_Y                                           # 256 voxels / sample


# ---------------- static geometry helpers (plain JAX glue) ----------------
def calculate_birds_eye_view_parameters():
    res = jnp.array([X_BOUND[2], Y_BOUND[2], Z_BOUND[2]], jnp.float32)
    start = jnp.array([X_BOUND[0] + X_BOUND[2] / 2.0,
                       Y_BOUND[0] + Y_BOUND[2] / 2.0,
                       Z_BOUND[0] + Z_BOUND[2] / 2.0], jnp.float32)
    dim = jnp.array([BEV_X, BEV_Y, BEV_Z], jnp.int32)
    return res, start, dim


def create_frustum():
    depth = jnp.arange(D_BOUND[0], D_BOUND[1], D_BOUND[2], dtype=jnp.float32)
    D = depth.shape[0]
    xg = jnp.linspace(0.0, IMG_W - 1, FEAT_W, dtype=jnp.float32)
    yg = jnp.linspace(0.0, IMG_H - 1, FEAT_H, dtype=jnp.float32)
    depth_g = jnp.broadcast_to(depth[:, None, None], (D, FEAT_H, FEAT_W))
    x_g = jnp.broadcast_to(xg[None, None, :], (D, FEAT_H, FEAT_W))
    y_g = jnp.broadcast_to(yg[None, :, None], (D, FEAT_H, FEAT_W))
    return jnp.stack([x_g, y_g, depth_g], axis=-1)            # (D, fH, fW, 3)


# ---------------- the single fused Pallas kernel ----------------
def _fiery_fused_kernel(x_ref, idx_ref, valid_ref,
                        w1_ref, b1_ref, w2_ref, b2_ref,
                        w3_ref, b3_ref, wn_ref, bn_ref, wh_ref, bh_ref,
                        o_ref, *, depth_ch, feat_ch, bev_y, vb):
    mb = x_ref.shape[1]                                       # pixels of this sample

    # ---- per-pixel encoder MLP (channels on sublanes, pixels on lanes) ----
    h = jnp.maximum(
        jnp.dot(w1_ref[...], x_ref[...], preferred_element_type=jnp.float32)
        + b1_ref[...], 0.0)                                   # (H, mb)
    y = jnp.dot(w2_ref[...], h, preferred_element_type=jnp.float32) + b2_ref[...]
    logits = y[:depth_ch, :]                                  # (D, mb)
    feats = y[depth_ch:depth_ch + feat_ch, :]                 # (C, mb)

    # depth softmax across sublanes (exact, matches reference lift-splat)
    m = jnp.max(logits, axis=0, keepdims=True)
    e = jnp.exp(logits - m)
    p = e / jnp.sum(e, axis=0, keepdims=True)                 # (D, mb)

    # ---- softmax-weighted scatter matrix (batch-local) ----
    # W[v, m] = sum_d [idx[d, m] == v] * p[d, m];  idx == -1 (outside BEV) never
    # matches, reproducing the reference mask filter.  Equivalent to
    # VoxelsSumming + camera sum for z-dim == 1, computed exactly in f32.
    idx = idx_ref[...]
    vox = jax.lax.broadcasted_iota(jnp.int32, (vb, mb), 0)
    w_scatter = jnp.zeros((vb, mb), jnp.float32)
    for d in range(depth_ch):                                 # static, D = 8
        w_scatter = w_scatter + jnp.where(vox == idx[d:d + 1, :],
                                          p[d:d + 1, :], 0.0)

    # ---- BEV voxel pooling:  bev (C, vb) = feats (C, mb) @ W^T ----
    bev = jax.lax.dot_general(feats, w_scatter, (((1,), (1,)), ((), ())),
                              preferred_element_type=jnp.float32)

    # ---- detection backbone: 3x3 "same" conv as ONE im2col matmul ----
    # 9 lane rolls (XLU) of the (C, vb) BEV; the pre-broadcast validity mask
    # zeroes taps whose neighbour falls outside the 16x16 grid (also kills the
    # cyclic wrap of the roll).  Then 1x1 neck and 1x1 head (padded rows).
    taps = []
    for t in range(9):
        dx, dy = t // 3 - 1, t % 3 - 1
        s = dx * bev_y + dy
        taps.append(bev if s == 0
                    else pltpu.roll(bev, shift=(-s) % vb, axis=1))
    im2col = jnp.concatenate(taps, axis=0) * valid_ref[...]   # (9C, vb)
    conv = jnp.maximum(
        jnp.dot(w3_ref[...], im2col, preferred_element_type=jnp.float32)
        + b3_ref[...], 0.0)                                   # (32, vb)
    neck = jnp.maximum(
        jnp.dot(wn_ref[...], conv, preferred_element_type=jnp.float32)
        + bn_ref[...], 0.0)                                   # (32, vb)
    o_ref[...] = (jnp.dot(wh_ref[...], neck, preferred_element_type=jnp.float32)
                  + bh_ref[...])                              # (16, vb) lane-dense


def fiery_fused(x_t, idx, valid_t, params, bs):
    """x_t:(8,M) f32, idx:(D,M) int32, valid_t:(9C,VB) f32.  Out: (16, bs*VB)."""
    M = x_t.shape[1]
    assert M % bs == 0
    mb = M // bs
    assert mb % 128 == 0, "per-sample pixel count must be a multiple of 128"

    kernel = functools.partial(_fiery_fused_kernel, depth_ch=DEPTH_CH,
                               feat_ch=ENC_OUT_C, bev_y=BEV_Y, vb=VB)

    def full(a):
        return pl.BlockSpec(a.shape, lambda b: (0, 0))

    return pl.pallas_call(
        kernel,
        out_shape=jax.ShapeDtypeStruct((HEAD_ROWS, bs * VB), jnp.float32),
        grid=(bs,),
        in_specs=[
            pl.BlockSpec((ENC_IN_C_PAD, mb), lambda b: (0, b)),   # pixels of sample b
            pl.BlockSpec((DEPTH_CH, mb), lambda b: (0, b)),       # voxel idx of sample b
            full(valid_t),
            full(params['w1']), full(params['b1']),
            full(params['w2']), full(params['b2']),
            full(params['w3']), full(params['b3']),
            full(params['wn']), full(params['bn']),
            full(params['wh']), full(params['bh']),
        ],
        out_specs=pl.BlockSpec((HEAD_ROWS, VB), lambda b: (0, b)),
        compiler_params=pltpu.CompilerParams(
            dimension_semantics=("parallel",)),                   # 2 TCs on v7x
    )(x_t, idx, valid_t,
      params['w1'], params['b1'], params['w2'], params['b2'],
      params['w3'], params['b3'], params['wn'], params['bn'],
      params['wh'], params['bh'])


# ---------------- parameters (stored directly in kernel layout) ----------------
def init_params(key):
    ks = jax.random.split(key, 5)
    s = 0.1
    wh = jnp.zeros((HEAD_ROWS, NECK_C), jnp.float32)
    wh = wh.at[:N_CLS + N_REG, :].set(
        s * jax.random.normal(ks[4], (N_CLS + N_REG, NECK_C), jnp.float32))
    res, start, dim = calculate_birds_eye_view_parameters()
    return {
        'frustum': create_frustum(),
        'bev_resolution': res, 'bev_start': start, 'bev_dim': dim,
        # encoder per-pixel MLP (1x1 convs), (out_ch, in_ch) layout
        'w1': s * jax.random.normal(ks[0], (ENC_HIDDEN, ENC_IN_C_PAD), jnp.float32),
        'b1': jnp.zeros((ENC_HIDDEN, 1), jnp.float32),
        'w2': s * jax.random.normal(ks[1], (DEPTH_CH + ENC_OUT_C, ENC_HIDDEN), jnp.float32),
        'b2': jnp.zeros((DEPTH_CH + ENC_OUT_C, 1), jnp.float32),
        # detection: 3x3 conv backbone (im2col layout), 1x1 neck, 1x1 head (padded rows)
        'w3': s * jax.random.normal(ks[2], (BACKBONE_C, 9 * ENC_OUT_C), jnp.float32),
        'b3': jnp.zeros((BACKBONE_C, 1), jnp.float32),
        'wn': s * jax.random.normal(ks[3], (NECK_C, BACKBONE_C), jnp.float32),
        'bn': jnp.zeros((NECK_C, 1), jnp.float32),
        'wh': wh,
        'bh': jnp.zeros((HEAD_ROWS, 1), jnp.float32),
    }


# ---------------- forward pass (XLA glue + 1 Pallas call) ----------------
def fiery_forward(params, image, intrinsics, extrinsics, future_egomotion):
    B, _, N, Cimg, H, W = image.shape
    # slice to receptive field (== 1)
    image = image[:, :RECEPTIVE_FIELD]
    intrinsics = intrinsics[:, :RECEPTIVE_FIELD]
    extrinsics = extrinsics[:, :RECEPTIVE_FIELD]
    S = RECEPTIVE_FIELD
    BS = B * S
    M = BS * N * FEAT_H * FEAT_W

    # ---- calculate_birds_eye_view_features ----
    img_p = image.reshape(BS, N, Cimg, H, W)            # pack_sequence_dim
    intr_p = intrinsics.reshape(BS, N, 3, 3)
    extr_p = extrinsics.reshape(BS, N, 4, 4)

    # get_geometry (tiny 3x3 math -- plain JAX glue)
    rot = extr_p[..., :3, :3]
    trans = extr_p[..., :3, 3]
    frustum = params['frustum']                          # (D, fH, fW, 3)
    pts = jnp.concatenate([frustum[..., :2] * frustum[..., 2:3],
                           frustum[..., 2:3]], axis=-1)
    combined = rot @ jnp.linalg.inv(intr_p)              # (BS, N, 3, 3)
    geom = (jnp.einsum('bnij,dhwj->bndhwi', combined, pts)
            + trans[:, :, None, None, None, :])          # (BS, N, D, fH, fW, 3)

    # encoder_forward input:
    # TODO(synk): the EfficientNet image backbone is replaced by an 8x8 average
    # pool feeding the fused in-kernel per-pixel MLP; the lift itself is exact.
    feat_small = img_p.reshape(BS, N, Cimg, FEAT_H, DOWNSAMPLE,
                               FEAT_W, DOWNSAMPLE).mean(axis=(4, 6))   # (BS,N,C,fh,fw)
    x_t = feat_small.transpose(2, 0, 1, 3, 4).reshape(Cimg, M)
    x_t = jnp.pad(x_t, ((0, ENC_IN_C_PAD - Cimg), (0, 0)))             # (8, M)

    # projection_to_birds_eye_view: batch-local voxel indices (-1 = outside BEV).
    # torch `.long()` truncates toward zero -> astype(int32) matches.
    bev_res, bev_start = params['bev_resolution'], params['bev_start']
    gidx = ((geom - (bev_start - bev_res / 2.0)) / bev_res).astype(jnp.int32)
    gx, gy, gz = gidx[..., 0], gidx[..., 1], gidx[..., 2]
    mask = ((gx >= 0) & (gx < BEV_X) & (gy >= 0) & (gy < BEV_Y)
            & (gz >= 0) & (gz < BEV_Z))
    idx = jnp.where(mask, gx * BEV_Y + gy, -1).astype(jnp.int32)  # (BS,N,D,fh,fw)
    idx = idx.transpose(2, 0, 1, 3, 4).reshape(DEPTH_CH, M)       # depth-major rows

    # Static 3x3-conv validity mask (zero padding), pre-broadcast to the im2col
    # row layout so the kernel needs a single elementwise multiply (no per-tap
    # column slices / lane broadcasts).  Identical for every sample.
    vx = jnp.arange(BEV_X)
    vy = jnp.arange(BEV_Y)
    taps = []
    for t in range(9):
        dx, dy = t // 3 - 1, t % 3 - 1
        ok = (((vx + dx >= 0) & (vx + dx < BEV_X))[:, None]
              & ((vy + dy >= 0) & (vy + dy < BEV_Y))[None, :])
        taps.append(ok.reshape(-1).astype(jnp.float32))           # (256,)
    valid_t = jnp.repeat(jnp.stack(taps, axis=0), ENC_OUT_C, axis=0)  # (144, 256)

    # cumulative_warp_features: identity for receptive_field == 1.
    # TODO(synk): bilinear grid_sample warp for receptive_field > 1 not implemented.
    # temporal_model is identity and n_future == 0, so the pooled BEV feeds the
    # detection branch directly inside the fused kernel (never leaves VMEM).
    # TODO(synk): external mmdet3d build_backbone/neck/head have no defined
    # semantics here; replaced by a deterministic 3x3-conv backbone, 1x1 neck
    # and 1x1 cls/reg head, fused into the same Pallas kernel.
    head_flat = fiery_fused(x_t, idx, valid_t, params, BS)        # (16, BS*256)

    head = head_flat[:N_CLS + N_REG, :].reshape(N_CLS + N_REG, BS, BEV_X, BEV_Y)
    head = head.transpose(1, 0, 2, 3)                             # NCHW at boundary
    detection_output = {'cls': head[:, :N_CLS], 'reg': head[:, N_CLS:]}

    return {'detection_output': detection_output}


if __name__ == "__main__":
    key = jax.random.PRNGKey(0)
    k_img, k_param = jax.random.split(key, 2)
    B, S, N = 2, 1, 2

    image = jax.random.normal(k_img, (B, S, N, 3, IMG_H, IMG_W), jnp.float32)

    # intrinsics: pinhole with fx=fy=32, cx=cy=32
    K = jnp.array([[32.0, 0.0, 32.0],
                   [0.0, 32.0, 32.0],
                   [0.0, 0.0, 1.0]], jnp.float32)
    intrinsics = jnp.broadcast_to(K, (B, S, N, 3, 3))

    # extrinsics: identity rotation, small per-camera translation
    E = jnp.broadcast_to(jnp.eye(4, dtype=jnp.float32), (B, S, N, 4, 4))
    trans = jnp.array([[0.5, 0.0, 0.0], [-0.5, 0.0, 0.0]], jnp.float32)
    E = E.at[..., :3, 3].set(jnp.broadcast_to(trans, (B, S, N, 3)))
    extrinsics = E

    future_egomotion = jnp.zeros((B, S, 6), jnp.float32)

    params = init_params(k_param)
    out = fiery_forward(params, image, intrinsics, extrinsics, future_egomotion)
    out = jax.tree_util.tree_map(jax.block_until_ready, out)

    cls = out['detection_output']['cls']
    reg = out['detection_output']['reg']
    assert cls.shape == (B, N_CLS, BEV_X, BEV_Y)
    assert reg.shape == (B, N_REG, BEV_X, BEV_Y)
    assert bool(jnp.all(jnp.isfinite(cls))) and bool(jnp.all(jnp.isfinite(reg)))
    print("KERNEL_OK")
</pallas_src>

<mosaic_0001>
module attributes {stable_mosaic.version = 11 : i64} {
  func.func @_fiery_fused_kernel(%arg0: i32, %arg1: memref<8x128xf32, #tpu.memory_space<vmem>>, %arg2: memref<8x128xi32, #tpu.memory_space<vmem>>, %arg3: memref<144x256xf32, #tpu.memory_space<vmem>>, %arg4: memref<32x8xf32, #tpu.memory_space<vmem>>, %arg5: memref<32x1xf32, #tpu.memory_space<vmem>>, %arg6: memref<24x32xf32, #tpu.memory_space<vmem>>, %arg7: memref<24x1xf32, #tpu.memory_space<vmem>>, %arg8: memref<32x144xf32, #tpu.memory_space<vmem>>, %arg9: memref<32x1xf32, #tpu.memory_space<vmem>>, %arg10: memref<32x32xf32, #tpu.memory_space<vmem>>, %arg11: memref<32x1xf32, #tpu.memory_space<vmem>>, %arg12: memref<16x32xf32, #tpu.memory_space<vmem>>, %arg13: memref<16x1xf32, #tpu.memory_space<vmem>>, %arg14: memref<16x256xf32, #tpu.memory_space<vmem>>) attributes {dimension_semantics = [#tpu.dimension_semantics<parallel>], iteration_bounds = array<i64: 2>, scalar_prefetch = 0 : i64, scratch_operands = 0 : i64, tpu.core_type = #tpu.core_type<tc>, window_params = [{transform_indices = @transform_0, window_bounds = array<i64: 8, 128>}, {transform_indices = @transform_1, window_bounds = array<i64: 8, 128>}, {pipeline_mode = #tpu.pipeline_mode<synchronous>, transform_indices = @transform_2, window_bounds = array<i64: 144, 256>}, {pipeline_mode = #tpu.pipeline_mode<synchronous>, transform_indices = @transform_3, window_bounds = array<i64: 32, 8>}, {pipeline_mode = #tpu.pipeline_mode<synchronous>, transform_indices = @transform_4, window_bounds = array<i64: 32, 1>}, {pipeline_mode = #tpu.pipeline_mode<synchronous>, transform_indices = @transform_5, window_bounds = array<i64: 24, 32>}, {pipeline_mode = #tpu.pipeline_mode<synchronous>, transform_indices = @transform_6, window_bounds = array<i64: 24, 1>}, {pipeline_mode = #tpu.pipeline_mode<synchronous>, transform_indices = @transform_7, window_bounds = array<i64: 32, 144>}, {pipeline_mode = #tpu.pipeline_mode<synchronous>, transform_indices = @transform_8, window_bounds = array<i64: 32, 1>}, {pipeline_mode = #tpu.pipeline_mode<synchronous>, transform_indices = @transform_9, window_bounds = array<i64: 32, 32>}, {pipeline_mode = #tpu.pipeline_mode<synchronous>, transform_indices = @transform_10, window_bounds = array<i64: 32, 1>}, {pipeline_mode = #tpu.pipeline_mode<synchronous>, transform_indices = @transform_11, window_bounds = array<i64: 16, 32>}, {pipeline_mode = #tpu.pipeline_mode<synchronous>, transform_indices = @transform_12, window_bounds = array<i64: 16, 1>}, {transform_indices = @transform_13, window_bounds = array<i64: 16, 256>}]} {
    %c0 = arith.constant 0 : index
    %c0_0 = arith.constant 0 : index
    %0 = vector.load %arg4[%c0, %c0_0] : memref<32x8xf32, #tpu.memory_space<vmem>>, vector<32x8xf32>
    %c0_1 = arith.constant 0 : index
    %c0_2 = arith.constant 0 : index
    %1 = vector.load %arg1[%c0_1, %c0_2] : memref<8x128xf32, #tpu.memory_space<vmem>>, vector<8x128xf32>
    %cst = arith.constant dense<0.000000e+00> : vector<32x128xf32>
    %2 = tpu.matmul %0, %1, %cst {dimension_numbers = #tpu.dot_dimension_numbers<[1], [0], [0], [1], [0, 0, 1, 1], [], []>} : vector<32x8xf32>, vector<8x128xf32>, vector<32x128xf32> -> vector<32x128xf32>
    %c0_3 = arith.constant 0 : index
    %c0_4 = arith.constant 0 : index
    %3 = vector.load %arg5[%c0_3, %c0_4] : memref<32x1xf32, #tpu.memory_space<vmem>>, vector<32x1xf32>
    %4 = vector.broadcast %3 : vector<32x1xf32> to vector<32x128xf32>
    %5 = arith.addf %2, %4 : vector<32x128xf32>
    %cst_5 = arith.constant 0.000000e+00 : f32
    %6 = vector.broadcast %cst_5 : f32 to vector<32x128xf32>
    %7 = arith.maximumf %5, %6 : vector<32x128xf32>
    %c0_6 = arith.constant 0 : index
    %c0_7 = arith.constant 0 : index
    %8 = vector.load %arg6[%c0_6, %c0_7] : memref<24x32xf32, #tpu.memory_space<vmem>>, vector<24x32xf32>
    %cst_8 = arith.constant dense<0.000000e+00> : vector<24x128xf32>
    %9 = tpu.matmul %8, %7, %cst_8 {dimension_numbers = #tpu.dot_dimension_numbers<[1], [0], [0], [1], [0, 0, 1, 1], [], []>} : vector<24x32xf32>, vector<32x128xf32>, vector<24x128xf32> -> vector<24x128xf32>
    %c0_9 = arith.constant 0 : index
    %c0_10 = arith.constant 0 : index
    %10 = vector.load %arg7[%c0_9, %c0_10] : memref<24x1xf32, #tpu.memory_space<vmem>>, vector<24x1xf32>
    %11 = vector.broadcast %10 : vector<24x1xf32> to vector<24x128xf32>
    %12 = arith.addf %9, %11 : vector<24x128xf32>
    %13 = vector.extract_strided_slice %12 {offsets = [0, 0], sizes = [8, 128], strides = [1, 1]} : vector<24x128xf32> to vector<8x128xf32>
    %14 = vector.extract_strided_slice %12 {offsets = [8, 0], sizes = [16, 128], strides = [1, 1]} : vector<24x128xf32> to vector<16x128xf32>
    %cst_11 = arith.constant dense<0xFF800000> : vector<128xf32>
    %15 = vector.multi_reduction <maximumf>, %13, %cst_11 [0] : vector<8x128xf32> to vector<128xf32>
    %16 = vector.shape_cast %15 : vector<128xf32> to vector<1x128xf32>
    %17 = vector.broadcast %16 : vector<1x128xf32> to vector<8x128xf32>
    %18 = arith.subf %13, %17 : vector<8x128xf32>
    %19 = math.exp %18 : vector<8x128xf32>
    %cst_12 = arith.constant dense<0.000000e+00> : vector<128xf32>
    %20 = vector.multi_reduction <add>, %19, %cst_12 [0] : vector<8x128xf32> to vector<128xf32>
    %21 = vector.shape_cast %20 : vector<128xf32> to vector<1x128xf32>
    %22 = vector.broadcast %21 : vector<1x128xf32> to vector<8x128xf32>
    %23 = arith.divf %19, %22 : vector<8x128xf32>
    %c0_13 = arith.constant 0 : index
    %c0_14 = arith.constant 0 : index
    %24 = vector.load %arg2[%c0_13, %c0_14] : memref<8x128xi32, #tpu.memory_space<vmem>>, vector<8x128xi32>
    %25 = tpu.iota {dimensions = array<i32: 0>} : vector<256x128xi32>
    %cst_15 = arith.constant 0.000000e+00 : f32
    %26 = vector.broadcast %cst_15 : f32 to vector<256x128xf32>
    %27 = vector.extract_strided_slice %24 {offsets = [0, 0], sizes = [1, 128], strides = [1, 1]} : vector<8x128xi32> to vector<1x128xi32>
    %28 = vector.broadcast %27 : vector<1x128xi32> to vector<256x128xi32>
    %29 = arith.cmpi eq, %25, %28 : vector<256x128xi32>
    %30 = vector.extract_strided_slice %23 {offsets = [0, 0], sizes = [1, 128], strides = [1, 1]} : vector<8x128xf32> to vector<1x128xf32>
    %cst_16 = arith.constant 0.000000e+00 : f32
    %31 = vector.shape_cast %30 : vector<1x128xf32> to vector<1x128xf32>
    %32 = vector.broadcast %31 : vector<1x128xf32> to vector<256x128xf32>
    %33 = vector.broadcast %cst_16 : f32 to vector<256x128xf32>
    %34 = arith.select %29, %32, %33 : vector<256x128xi1>, vector<256x128xf32>
    %35 = arith.addf %26, %34 : vector<256x128xf32>
    %36 = vector.extract_strided_slice %24 {offsets = [1, 0], sizes = [1, 128], strides = [1, 1]} : vector<8x128xi32> to vector<1x128xi32>
    %37 = vector.broadcast %36 : vector<1x128xi32> to vector<256x128xi32>
    %38 = arith.cmpi eq, %25, %37 : vector<256x128xi32>
    %39 = vector.extract_strided_slice %23 {offsets = [1, 0], sizes = [1, 128], strides = [1, 1]} : vector<8x128xf32> to vector<1x128xf32>
    %cst_17 = arith.constant 0.000000e+00 : f32
    %40 = vector.shape_cast %39 : vector<1x128xf32> to vector<1x128xf32>
    %41 = vector.broadcast %40 : vector<1x128xf32> to vector<256x128xf32>
    %42 = vector.broadcast %cst_17 : f32 to vector<256x128xf32>
    %43 = arith.select %38, %41, %42 : vector<256x128xi1>, vector<256x128xf32>
    %44 = arith.addf %35, %43 : vector<256x128xf32>
    %45 = vector.extract_strided_slice %24 {offsets = [2, 0], sizes = [1, 128], strides = [1, 1]} : vector<8x128xi32> to vector<1x128xi32>
    %46 = vector.broadcast %45 : vector<1x128xi32> to vector<256x128xi32>
    %47 = arith.cmpi eq, %25, %46 : vector<256x128xi32>
    %48 = vector.extract_strided_slice %23 {offsets = [2, 0], sizes = [1, 128], strides = [1, 1]} : vector<8x128xf32> to vector<1x128xf32>
    %cst_18 = arith.constant 0.000000e+00 : f32
    %49 = vector.shape_cast %48 : vector<1x128xf32> to vector<1x128xf32>
    %50 = vector.broadcast %49 : vector<1x128xf32> to vector<256x128xf32>
    %51 = vector.broadcast %cst_18 : f32 to vector<256x128xf32>
    %52 = arith.select %47, %50, %51 : vector<256x128xi1>, vector<256x128xf32>
    %53 = arith.addf %44, %52 : vector<256x128xf32>
    %54 = vector.extract_strided_slice %24 {offsets = [3, 0], sizes = [1, 128], strides = [1, 1]} : vector<8x128xi32> to vector<1x128xi32>
    %55 = vector.broadcast %54 : vector<1x128xi32> to vector<256x128xi32>
    %56 = arith.cmpi eq, %25, %55 : vector<256x128xi32>
    %57 = vector.extract_strided_slice %23 {offsets = [3, 0], sizes = [1, 128], strides = [1, 1]} : vector<8x128xf32> to vector<1x128xf32>
    %cst_19 = arith.constant 0.000000e+00 : f32
    %58 = vector.shape_cast %57 : vector<1x128xf32> to vector<1x128xf32>
    %59 = vector.broadcast %58 : vector<1x128xf32> to vector<256x128xf32>
    %60 = vector.broadcast %cst_19 : f32 to vector<256x128xf32>
    %61 = arith.select %56, %59, %60 : vector<256x128xi1>, vector<256x128xf32>
    %62 = arith.addf %53, %61 : vector<256x128xf32>
    %63 = vector.extract_strided_slice %24 {offsets = [4, 0], sizes = [1, 128], strides = [1, 1]} : vector<8x128xi32> to vector<1x128xi32>
    %64 = vector.broadcast %63 : vector<1x128xi32> to vector<256x128xi32>
    %65 = arith.cmpi eq, %25, %64 : vector<256x128xi32>
    %66 = vector.extract_strided_slice %23 {offsets = [4, 0], sizes = [1, 128], strides = [1, 1]} : vector<8x128xf32> to vector<1x128xf32>
    %cst_20 = arith.constant 0.000000e+00 : f32
    %67 = vector.shape_cast %66 : vector<1x128xf32> to vector<1x128xf32>
    %68 = vector.broadcast %67 : vector<1x128xf32> to vector<256x128xf32>
    %69 = vector.broadcast %cst_20 : f32 to vector<256x128xf32>
    %70 = arith.select %65, %68, %69 : vector<256x128xi1>, vector<256x128xf32>
    %71 = arith.addf %62, %70 : vector<256x128xf32>
    %72 = vector.extract_strided_slice %24 {offsets = [5, 0], sizes = [1, 128], strides = [1, 1]} : vector<8x128xi32> to vector<1x128xi32>
    %73 = vector.broadcast %72 : vector<1x128xi32> to vector<256x128xi32>
    %74 = arith.cmpi eq, %25, %73 : vector<256x128xi32>
    %75 = vector.extract_strided_slice %23 {offsets = [5, 0], sizes = [1, 128], strides = [1, 1]} : vector<8x128xf32> to vector<1x128xf32>
    %cst_21 = arith.constant 0.000000e+00 : f32
    %76 = vector.shape_cast %75 : vector<1x128xf32> to vector<1x128xf32>
    %77 = vector.broadcast %76 : vector<1x128xf32> to vector<256x128xf32>
    %78 = vector.broadcast %cst_21 : f32 to vector<256x128xf32>
    %79 = arith.select %74, %77, %78 : vector<256x128xi1>, vector<256x128xf32>
    %80 = arith.addf %71, %79 : vector<256x128xf32>
    %81 = vector.extract_strided_slice %24 {offsets = [6, 0], sizes = [1, 128], strides = [1, 1]} : vector<8x128xi32> to vector<1x128xi32>
    %82 = vector.broadcast %81 : vector<1x128xi32> to vector<256x128xi32>
    %83 = arith.cmpi eq, %25, %82 : vector<256x128xi32>
    %84 = vector.extract_strided_slice %23 {offsets = [6, 0], sizes = [1, 128], strides = [1, 1]} : vector<8x128xf32> to vector<1x128xf32>
    %cst_22 = arith.constant 0.000000e+00 : f32
    %85 = vector.shape_cast %84 : vector<1x128xf32> to vector<1x128xf32>
    %86 = vector.broadcast %85 : vector<1x128xf32> to vector<256x128xf32>
    %87 = vector.broadcast %cst_22 : f32 to vector<256x128xf32>
    %88 = arith.select %83, %86, %87 : vector<256x128xi1>, vector<256x128xf32>
    %89 = arith.addf %80, %88 : vector<256x128xf32>
    %90 = vector.extract_strided_slice %24 {offsets = [7, 0], sizes = [1, 128], strides = [1, 1]} : vector<8x128xi32> to vector<1x128xi32>
    %91 = vector.broadcast %90 : vector<1x128xi32> to vector<256x128xi32>
    %92 = arith.cmpi eq, %25, %91 : vector<256x128xi32>
    %93 = vector.extract_strided_slice %23 {offsets = [7, 0], sizes = [1, 128], strides = [1, 1]} : vector<8x128xf32> to vector<1x128xf32>
    %cst_23 = arith.constant 0.000000e+00 : f32
    %94 = vector.shape_cast %93 : vector<1x128xf32> to vector<1x128xf32>
    %95 = vector.broadcast %94 : vector<1x128xf32> to vector<256x128xf32>
    %96 = vector.broadcast %cst_23 : f32 to vector<256x128xf32>
    %97 = arith.select %92, %95, %96 : vector<256x128xi1>, vector<256x128xf32>
    %98 = arith.addf %89, %97 : vector<256x128xf32>
    %cst_24 = arith.constant dense<0.000000e+00> : vector<16x256xf32>
    %99 = tpu.matmul %14, %98, %cst_24 {dimension_numbers = #tpu.dot_dimension_numbers<[1], [1], [0], [0], [0, 0, 1, 0], [], []>} : vector<16x128xf32>, vector<256x128xf32>, vector<16x256xf32> -> vector<16x256xf32>
    %c17_i32 = arith.constant 17 : i32
    %100 = tpu.dynamic_rotate %99 by %c17_i32 dim 1 : vector<16x256xf32>, i32 -> vector<16x256xf32>
    %c16_i32 = arith.constant 16 : i32
    %101 = tpu.dynamic_rotate %99 by %c16_i32 dim 1 : vector<16x256xf32>, i32 -> vector<16x256xf32>
    %c15_i32 = arith.constant 15 : i32
    %102 = tpu.dynamic_rotate %99 by %c15_i32 dim 1 : vector<16x256xf32>, i32 -> vector<16x256xf32>
    %c1_i32 = arith.constant 1 : i32
    %103 = tpu.dynamic_rotate %99 by %c1_i32 dim 1 : vector<16x256xf32>, i32 -> vector<16x256xf32>
    %c255_i32 = arith.constant 255 : i32
    %104 = tpu.dynamic_rotate %99 by %c255_i32 dim 1 : vector<16x256xf32>, i32 -> vector<16x256xf32>
    %c241_i32 = arith.constant 241 : i32
    %105 = tpu.dynamic_rotate %99 by %c241_i32 dim 1 : vector<16x256xf32>, i32 -> vector<16x256xf32>
    %c240_i32 = arith.constant 240 : i32
    %106 = tpu.dynamic_rotate %99 by %c240_i32 dim 1 : vector<16x256xf32>, i32 -> vector<16x256xf32>
    %c239_i32 = arith.constant 239 : i32
    %107 = tpu.dynamic_rotate %99 by %c239_i32 dim 1 : vector<16x256xf32>, i32 -> vector<16x256xf32>
    %108 = tpu.concatenate %100, %101, %102, %103, %99, %104, %105, %106, %107 in 0 : vector<16x256xf32>, vector<16x256xf32>, vector<16x256xf32>, vector<16x256xf32>, vector<16x256xf32>, vector<16x256xf32>, vector<16x256xf32>, vector<16x256xf32>, vector<16x256xf32> -> vector<144x256xf32>
    %c0_25 = arith.constant 0 : index
    %c0_26 = arith.constant 0 : index
    %109 = vector.load %arg3[%c0_25, %c0_26] : memref<144x256xf32, #tpu.memory_space<vmem>>, vector<144x256xf32>
    %110 = arith.mulf %108, %109 : vector<144x256xf32>
    %c0_27 = arith.constant 0 : index
    %c0_28 = arith.constant 0 : index
    %111 = vector.load %arg8[%c0_27, %c0_28] : memref<32x144xf32, #tpu.memory_space<vmem>>, vector<32x144xf32>
    %cst_29 = arith.constant dense<0.000000e+00> : vector<32x256xf32>
    %112 = tpu.matmul %111, %110, %cst_29 {dimension_numbers = #tpu.dot_dimension_numbers<[1], [0], [0], [1], [0, 0, 1, 1], [], []>} : vector<32x144xf32>, vector<144x256xf32>, vector<32x256xf32> -> vector<32x256xf32>
    %c0_30 = arith.constant 0 : index
    %c0_31 = arith.constant 0 : index
    %113 = vector.load %arg9[%c0_30, %c0_31] : memref<32x1xf32, #tpu.memory_space<vmem>>, vector<32x1xf32>
    %114 = vector.broadcast %113 : vector<32x1xf32> to vector<32x256xf32>
    %115 = arith.addf %112, %114 : vector<32x256xf32>
    %cst_32 = arith.constant 0.000000e+00 : f32
    %116 = vector.broadcast %cst_32 : f32 to vector<32x256xf32>
    %117 = arith.maximumf %115, %116 : vector<32x256xf32>
    %c0_33 = arith.constant 0 : index
    %c0_34 = arith.constant 0 : index
    %118 = vector.load %arg10[%c0_33, %c0_34] : memref<32x32xf32, #tpu.memory_space<vmem>>, vector<32x32xf32>
    %cst_35 = arith.constant dense<0.000000e+00> : vector<32x256xf32>
    %119 = tpu.matmul %118, %117, %cst_35 {dimension_numbers = #tpu.dot_dimension_numbers<[1], [0], [0], [1], [0, 0, 1, 1], [], []>} : vector<32x32xf32>, vector<32x256xf32>, vector<32x256xf32> -> vector<32x256xf32>
    %c0_36 = arith.constant 0 : index
    %c0_37 = arith.constant 0 : index
    %120 = vector.load %arg11[%c0_36, %c0_37] : memref<32x1xf32, #tpu.memory_space<vmem>>, vector<32x1xf32>
    %121 = vector.broadcast %120 : vector<32x1xf32> to vector<32x256xf32>
    %122 = arith.addf %119, %121 : vector<32x256xf32>
    %cst_38 = arith.constant 0.000000e+00 : f32
    %123 = vector.broadcast %cst_38 : f32 to vector<32x256xf32>
    %124 = arith.maximumf %122, %123 : vector<32x256xf32>
    %c0_39 = arith.constant 0 : index
    %c0_40 = arith.constant 0 : index
    %125 = vector.load %arg12[%c0_39, %c0_40] : memref<16x32xf32, #tpu.memory_space<vmem>>, vector<16x32xf32>
    %cst_41 = arith.constant dense<0.000000e+00> : vector<16x256xf32>
    %126 = tpu.matmul %125, %124, %cst_41 {dimension_numbers = #tpu.dot_dimension_numbers<[1], [0], [0], [1], [0, 0, 1, 1], [], []>} : vector<16x32xf32>, vector<32x256xf32>, vector<16x256xf32> -> vector<16x256xf32>
    %c0_42 = arith.constant 0 : index
    %c0_43 = arith.constant 0 : index
    %127 = vector.load %arg13[%c0_42, %c0_43] : memref<16x1xf32, #tpu.memory_space<vmem>>, vector<16x1xf32>
    %128 = vector.broadcast %127 : vector<16x1xf32> to vector<16x256xf32>
    %129 = arith.addf %126, %128 : vector<16x256xf32>
    %c0_44 = arith.constant 0 : index
    %c0_45 = arith.constant 0 : index
    %130 = vector.load %arg14[%c0_44, %c0_45] : memref<16x256xf32, #tpu.memory_space<vmem>>, vector<16x256xf32>
    tpu.vector_store %arg14[%c0_44, %c0_45], %129 {strides = array<i32>} : memref<16x256xf32, #tpu.memory_space<vmem>>, vector<16x256xf32>,
    return
  }
  func.func @transform_0(%arg0: i32) -> (i32, i32) {
    %c0_i32 = arith.constant 0 : i32
    %c0_i32_0 = arith.constant 0 : i32
    return %c0_i32, %arg0 : i32, i32
  }
  func.func @transform_1(%arg0: i32) -> (i32, i32) {
    %c0_i32 = arith.constant 0 : i32
    %c0_i32_0 = arith.constant 0 : i32
    return %c0_i32, %arg0 : i32, i32
  }
  func.func @transform_2(%arg0: i32) -> (i32, i32) {
    %c0_i32 = arith.constant 0 : i32
    %c0_i32_0 = arith.constant 0 : i32
    %c0_i32_1 = arith.constant 0 : i32
    return %c0_i32, %c0_i32_0 : i32, i32
  }
  func.func @transform_3(%arg0: i32) -> (i32, i32) {
    %c0_i32 = arith.constant 0 : i32
    %c0_i32_0 = arith.constant 0 : i32
    %c0_i32_1 = arith.constant 0 : i32
    return %c0_i32, %c0_i32_0 : i32, i32
  }
  func.func @transform_4(%arg0: i32) -> (i32, i32) {
    %c0_i32 = arith.constant 0 : i32
    %c0_i32_0 = arith.constant 0 : i32
    %c0_i32_1 = arith.constant 0 : i32
    return %c0_i32, %c0_i32_0 : i32, i32
  }
  func.func @transform_5(%arg0: i32) -> (i32, i32) {
    %c0_i32 = arith.constant 0 : i32
    %c0_i32_0 = arith.constant 0 : i32
    %c0_i32_1 = arith.constant 0 : i32
    return %c0_i32, %c0_i32_0 : i32, i32
  }
  func.func @transform_6(%arg0: i32) -> (i32, i32) {
    %c0_i32 = arith.constant 0 : i32
    %c0_i32_0 = arith.constant 0 : i32
    %c0_i32_1 = arith.constant 0 : i32
    return %c0_i32, %c0_i32_0 : i32, i32
  }
  func.func @transform_7(%arg0: i32) -> (i32, i32) {
    %c0_i32 = arith.constant 0 : i32
    %c0_i32_0 = arith.constant 0 : i32
    %c0_i32_1 = arith.constant 0 : i32
    return %c0_i32, %c0_i32_0 : i32, i32
  }
  func.func @transform_8(%arg0: i32) -> (i32, i32) {
    %c0_i32 = arith.constant 0 : i32
    %c0_i32_0 = arith.constant 0 : i32
    %c0_i32_1 = arith.constant 0 : i32
    return %c0_i32, %c0_i32_0 : i32, i32
  }
  func.func @transform_9(%arg0: i32) -> (i32, i32) {
    %c0_i32 = arith.constant 0 : i32
    %c0_i32_0 = arith.constant 0 : i32
    %c0_i32_1 = arith.constant 0 : i32
    return %c0_i32, %c0_i32_0 : i32, i32
  }
  func.func @transform_10(%arg0: i32) -> (i32, i32) {
    %c0_i32 = arith.constant 0 : i32
    %c0_i32_0 = arith.constant 0 : i32
    %c0_i32_1 = arith.constant 0 : i32
    return %c0_i32, %c0_i32_0 : i32, i32
  }
  func.func @transform_11(%arg0: i32) -> (i32, i32) {
    %c0_i32 = arith.constant 0 : i32
    %c0_i32_0 = arith.constant 0 : i32
    %c0_i32_1 = arith.constant 0 : i32
    return %c0_i32, %c0_i32_0 : i32, i32
  }
  func.func @transform_12(%arg0: i32) -> (i32, i32) {
    %c0_i32 = arith.constant 0 : i32
    %c0_i32_0 = arith.constant 0 : i32
    %c0_i32_1 = arith.constant 0 : i32
    return %c0_i32, %c0_i32_0 : i32, i32
  }
  func.func @transform_13(%arg0: i32) -> (i32, i32) {
    %c0_i32 = arith.constant 0 : i32
    %c0_i32_0 = arith.constant 0 : i32
    return %c0_i32, %arg0 : i32, i32
  }
}

</mosaic_0001>

<llo_original>
// kernel: tpu_custom_call.1
$region0: #{tpu_custom_call.1}
  #allocation0 [shape = 'u32[]', space=smem, size = 0x4, offset = 0x4, fixed_abs, tag = 'smem constant byte address 0x4 - core index']
  #allocation1 [shape = 'u32[72,128]{1,0:T(1,128)}', space=vmem, size = 0x9000, scoped, tag = 'internal scratch']
  %s0 = inlined_call_operand.vmem [shape: f32[8,256], index: 0, kind: input, shape index: {}]
  %s1 = inlined_call_operand.vmem [shape: s32[8,256], index: 1, kind: input, shape index: {}]
  %s2 = inlined_call_operand.hbm [shape: f32[144,256], index: 2, kind: input, shape index: {}]
  %s3 = inlined_call_operand.vmem [shape: f32[32,8], index: 3, kind: input, shape index: {}]
  %s4 = inlined_call_operand.vmem [shape: f32[32,1], index: 4, kind: input, shape index: {}]
  %s5 = inlined_call_operand.vmem [shape: f32[24,32], index: 5, kind: input, shape index: {}]
  %s6 = inlined_call_operand.vmem [shape: f32[24,1], index: 6, kind: input, shape index: {}]
  %s7 = inlined_call_operand.vmem [shape: f32[32,144], index: 7, kind: input, shape index: {}]
  %s8 = inlined_call_operand.vmem [shape: f32[32,1], index: 8, kind: input, shape index: {}]
  %s9 = inlined_call_operand.vmem [shape: f32[32,32], index: 9, kind: input, shape index: {}]
  %s10 = inlined_call_operand.vmem [shape: f32[32,1], index: 10, kind: input, shape index: {}]
  %s11 = inlined_call_operand.vmem [shape: f32[16,32], index: 11, kind: input, shape index: {}]
  %s12 = inlined_call_operand.vmem [shape: f32[16,1], index: 12, kind: input, shape index: {}]
  %s13 = inlined_call_operand.hbm [shape: f32[16,512], index: 13, kind: output, shape index: {}]
  %s14 = sld [smem:[#allocation0]]
  $region89: #{tpu_custom_call.1} parent=0
    _
  %s16 = ssub.s32 1, %s14
  %s17 = scalar_select 0, %s16, %s14
  $region1: #{tpu_custom_call.1} parent=0
    #allocation2 [shape = 'u8[147456]{0}', space=vmem, size = 0x24000, scoped, tag = 'input window, operand 2, single buffered']
    #allocation3 [shape = 's32[2]{0}', space=sflag, size = 0x8, scoped, tag = 'scoped memory for tpu_custom_call.1']
    #allocation4 [shape = 's32[2]{0}', space=sflag, size = 0x8, scoped, tag = 'scoped memory for tpu_custom_call.1']
    #allocation5 [shape = 'u8[32768]{0}', space=vmem, size = 0x8000, scoped, tag = 'output window, operand 0']
    %18 = vsyncpa [#allocation3], 0
    %19 = vsyncpa [#allocation4], 0
    %s20 = scalar_lea.sflag [#allocation4], 1
    %21 = vsyncpa %s20, 0
    loop: start=0, step=1, limit=4
    $region2: #{tpu_custom_call.1} parent=1 // loop_pre_header
      _
    $region3: #{tpu_custom_call.1} parent=1 // loop_header
      %s23 = sphi 0, %s27
      %p24 = scmp.ge.s32.totalorder %s23, 4
      %s33 = sphi 0, %s35
      %s36 = sphi 0, %s33
      %s37 = sphi 0, %s36
      %s53 = sphi 0, %s37
      %s59 = sphi 0, %s61
      %s62 = sphi 0, %s59
      %s63 = sphi 0, %s62
      %s79 = sphi 0, %s63
      %s83 = sphi 0, %s83
      %s85 = sphi 0, %s83
      %s86 = sphi 0, %s85
      %s100 = sphi 0, %s86
      %s104 = sphi 0, %s104
      %s106 = sphi 0, %s104
      %s107 = sphi 0, %s106
      %s121 = sphi 0, %s107
      %s125 = sphi 0, %s125
      %s127 = sphi 0, %s125
      %s128 = sphi 0, %s127
      %s142 = sphi 0, %s128
      %s146 = sphi 0, %s146
      %s148 = sphi 0, %s146
      %s149 = sphi 0, %s148
      %s163 = sphi 0, %s149
      %s167 = sphi 0, %s167
      %s169 = sphi 0, %s167
      %s170 = sphi 0, %s169
      %s184 = sphi 0, %s170
      %s188 = sphi 0, %s188
      %s190 = sphi 0, %s188
      %s191 = sphi 0, %s190
      %s205 = sphi 0, %s191
      %s209 = sphi 0, %s209
      %s211 = sphi 0, %s209
      %s212 = sphi 0, %s211
      %s226 = sphi 0, %s212
      %s230 = sphi 0, %s230
      %s232 = sphi 0, %s230
      %s233 = sphi 0, %s232
      %s247 = sphi 0, %s233
      %s251 = sphi 0, %s251
      %s253 = sphi 0, %s251
      %s254 = sphi 0, %s253
      %s268 = sphi 0, %s254
      %s272 = sphi 0, %s272
      %s274 = sphi 0, %s272
      %s275 = sphi 0, %s274
      %s289 = sphi 0, %s275
      %s293 = sphi 0, %s293
      %s295 = sphi 0, %s293
      %s296 = sphi 0, %s295
      %s310 = sphi 0, %s296
      %s316 = sphi 0, %s318
      %s319 = sphi 0, %s316
      %s320 = sphi 0, %s319
      %s336 = sphi 0, %s320
    $region4: #{tpu_custom_call.1} parent=1 // loop_header_branch
      %26 = sbr.rel (%p24) target = $region8
    $region5: #{tpu_custom_call.1} parent=1 // loop_body
      %s28 = ssub.s32 %s23, 1
      %s29 = ssub.s32 %s23, 2
      %s30 = sadd.s32 %s23, 1
      %s31 = ssub.s32 %s23, %s30
      %p32 = scmp.eq.s32.totalorder %s31, 0
      %s34 = sadd.s32 %s33, 1
      %s35 = scalar_select %p32, %s33, %s34
      %p38 = pneg %p32
      %p39 = scmp.eq.s32.totalorder %s23, 1
      %p40 = por %p38, %p39
      %p41 = scmp.ne.s32.totalorder %s33, %s36
      %p42 = scmp.eq.s32.totalorder %s23, 0
      %p43 = por %p41, %p42
      %p44 = scmp.ne.s32.totalorder %s33, %s36
      %p45 = scmp.eq.s32.totalorder %s28, 1
      %p46 = por %p44, %p45
      %p47 = scmp.ne.s32.totalorder %s36, %s37
      %p48 = scmp.eq.s32.totalorder %s28, 0
      %p49 = por %p47, %p48
      %p50 = scmp.ne.s32.totalorder %s36, %s37
      %p51 = scmp.eq.s32.totalorder %s29, 1
      %p52 = por %p50, %p51
      %p54 = scmp.ne.s32.totalorder %s37, %s53
      %p55 = scmp.eq.s32.totalorder %s29, 0
      %p56 = por %p54, %p55
      %s57 = ssub.s32 %s23, %s30
      %p58 = scmp.eq.s32.totalorder %s57, 0
      %s60 = sadd.s32 %s59, 1
      %s61 = scalar_select %p58, %s59, %s60
      %p64 = pneg %p58
      %p65 = scmp.eq.s32.totalorder %s23, 1
      %p66 = por %p64, %p65
      %p67 = scmp.ne.s32.totalorder %s59, %s62
      %p68 = scmp.eq.s32.totalorder %s23, 0
      %p69 = por %p67, %p68
      %p70 = scmp.ne.s32.totalorder %s59, %s62
      %p71 = scmp.eq.s32.totalorder %s28, 1
      %p72 = por %p70, %p71
      %p73 = scmp.ne.s32.totalorder %s62, %s63
      %p74 = scmp.eq.s32.totalorder %s28, 0
      %p75 = por %p73, %p74
      %p76 = scmp.ne.s32.totalorder %s62, %s63
      %p77 = scmp.eq.s32.totalorder %s29, 1
      %p78 = por %p76, %p77
      %p80 = scmp.ne.s32.totalorder %s63, %s79
      %p81 = scmp.eq.s32.totalorder %s29, 0
      %p82 = por %p80, %p81
      %s84 = sadd.s32 %s83, 1
      %p87 = scmp.eq.s32.totalorder %s23, 1
      %p88 = scmp.ne.s32.totalorder %s83, %s85
      %p89 = scmp.eq.s32.totalorder %s23, 0
      %p90 = por %p88, %p89
      %p91 = scmp.ne.s32.totalorder %s83, %s85
      %p92 = scmp.eq.s32.totalorder %s28, 1
      %p93 = por %p91, %p92
      %p94 = scmp.ne.s32.totalorder %s85, %s86
      %p95 = scmp.eq.s32.totalorder %s28, 0
      %p96 = por %p94, %p95
      %p97 = scmp.ne.s32.totalorder %s85, %s86
      %p98 = scmp.eq.s32.totalorder %s29, 1
      %p99 = por %p97, %p98
      %p101 = scmp.ne.s32.totalorder %s86, %s100
      %p102 = scmp.eq.s32.totalorder %s29, 0
      %p103 = por %p101, %p102
      %s105 = sadd.s32 %s104, 1
      %p108 = scmp.eq.s32.totalorder %s23, 1
      %p109 = scmp.ne.s32.totalorder %s104, %s106
      %p110 = scmp.eq.s32.totalorder %s23, 0
      %p111 = por %p109, %p110
      %p112 = scmp.ne.s32.totalorder %s104, %s106
      %p113 = scmp.eq.s32.totalorder %s28, 1
      %p114 = por %p112, %p113
      %p115 = scmp.ne.s32.totalorder %s106, %s107
      %p116 = scmp.eq.s32.totalorder %s28, 0
      %p117 = por %p115, %p116
      %p118 = scmp.ne.s32.totalorder %s106, %s107
      %p119 = scmp.eq.s32.totalorder %s29, 1
      %p120 = por %p118, %p119
      %p122 = scmp.ne.s32.totalorder %s107, %s121
      %p123 = scmp.eq.s32.totalorder %s29, 0
      %p124 = por %p122, %p123
      %s126 = sadd.s32 %s125, 1
      %p129 = scmp.eq.s32.totalorder %s23, 1
      %p130 = scmp.ne.s32.totalorder %s125, %s127
      %p131 = scmp.eq.s32.totalorder %s23, 0
      %p132 = por %p130, %p131
      %p133 = scmp.ne.s32.totalorder %s125, %s127
      %p134 = scmp.eq.s32.totalorder %s28, 1
      %p135 = por %p133, %p134
      %p136 = scmp.ne.s32.totalorder %s127, %s128
      %p137 = scmp.eq.s32.totalorder %s28, 0
      %p138 = por %p136, %p137
      %p139 = scmp.ne.s32.totalorder %s127, %s128
      %p140 = scmp.eq.s32.totalorder %s29, 1
      %p141 = por %p139, %p140
      %p143 = scmp.ne.s32.totalorder %s128, %s142
      %p144 = scmp.eq.s32.totalorder %s29, 0
      %p145 = por %p143, %p144
      %s147 = sadd.s32 %s146, 1
      %p150 = scmp.eq.s32.totalorder %s23, 1
      %p151 = scmp.ne.s32.totalorder %s146, %s148
      %p152 = scmp.eq.s32.totalorder %s23, 0
      %p153 = por %p151, %p152
      %p154 = scmp.ne.s32.totalorder %s146, %s148
      %p155 = scmp.eq.s32.totalorder %s28, 1
      %p156 = por %p154, %p155
      %p157 = scmp.ne.s32.totalorder %s148, %s149
      %p158 = scmp.eq.s32.totalorder %s28, 0
      %p159 = por %p157, %p158
      %p160 = scmp.ne.s32.totalorder %s148, %s149
      %p161 = scmp.eq.s32.totalorder %s29, 1
      %p162 = por %p160, %p161
      %p164 = scmp.ne.s32.totalorder %s149, %s163
      %p165 = scmp.eq.s32.totalorder %s29, 0
      %p166 = por %p164, %p165
      %s168 = sadd.s32 %s167, 1
      %p171 = scmp.eq.s32.totalorder %s23, 1
      %p172 = scmp.ne.s32.totalorder %s167, %s169
      %p173 = scmp.eq.s32.totalorder %s23, 0
      %p174 = por %p172, %p173
      %p175 = scmp.ne.s32.totalorder %s167, %s169
      %p176 = scmp.eq.s32.totalorder %s28, 1
      %p177 = por %p175, %p176
      %p178 = scmp.ne.s32.totalorder %s169, %s170
      %p179 = scmp.eq.s32.totalorder %s28, 0
      %p180 = por %p178, %p179
      %p181 = scmp.ne.s32.totalorder %s169, %s170
      %p182 = scmp.eq.s32.totalorder %s29, 1
      %p183 = por %p181, %p182
      %p185 = scmp.ne.s32.totalorder %s170, %s184
      %p186 = scmp.eq.s32.totalorder %s29, 0
      %p187 = por %p185, %p186
      %s189 = sadd.s32 %s188, 1
      %p192 = scmp.eq.s32.totalorder %s23, 1
      %p193 = scmp.ne.s32.totalorder %s188, %s190
      %p194 = scmp.eq.s32.totalorder %s23, 0
      %p195 = por %p193, %p194
      %p196 = scmp.ne.s32.totalorder %s188, %s190
      %p197 = scmp.eq.s32.totalorder %s28, 1
      %p198 = por %p196, %p197
      %p199 = scmp.ne.s32.totalorder %s190, %s191
      %p200 = scmp.eq.s32.totalorder %s28, 0
      %p201 = por %p199, %p200
      %p202 = scmp.ne.s32.totalorder %s190, %s191
      %p203 = scmp.eq.s32.totalorder %s29, 1
      %p204 = por %p202, %p203
      %p206 = scmp.ne.s32.totalorder %s191, %s205
      %p207 = scmp.eq.s32.totalorder %s29, 0
      %p208 = por %p206, %p207
      %s210 = sadd.s32 %s209, 1
      %p213 = scmp.eq.s32.totalorder %s23, 1
      %p214 = scmp.ne.s32.totalorder %s209, %s211
      %p215 = scmp.eq.s32.totalorder %s23, 0
      %p216 = por %p214, %p215
      %p217 = scmp.ne.s32.totalorder %s209, %s211
      %p218 = scmp.eq.s32.totalorder %s28, 1
      %p219 = por %p217, %p218
      %p220 = scmp.ne.s32.totalorder %s211, %s212
      %p221 = scmp.eq.s32.totalorder %s28, 0
      %p222 = por %p220, %p221
      %p223 = scmp.ne.s32.totalorder %s211, %s212
      %p224 = scmp.eq.s32.totalorder %s29, 1
      %p225 = por %p223, %p224
      %p227 = scmp.ne.s32.totalorder %s212, %s226
      %p228 = scmp.eq.s32.totalorder %s29, 0
      %p229 = por %p227, %p228
      %s231 = sadd.s32 %s230, 1
      %p234 = scmp.eq.s32.totalorder %s23, 1
      %p235 = scmp.ne.s32.totalorder %s230, %s232
      %p236 = scmp.eq.s32.totalorder %s23, 0
      %p237 = por %p235, %p236
      %p238 = scmp.ne.s32.totalorder %s230, %s232
      %p239 = scmp.eq.s32.totalorder %s28, 1
      %p240 = por %p238, %p239
      %p241 = scmp.ne.s32.totalorder %s232, %s233
      %p242 = scmp.eq.s32.totalorder %s28, 0
      %p243 = por %p241, %p242
      %p244 = scmp.ne.s32.totalorder %s232, %s233
      %p245 = scmp.eq.s32.totalorder %s29, 1
      %p246 = por %p244, %p245
      %p248 = scmp.ne.s32.totalorder %s233, %s247
      %p249 = scmp.eq.s32.totalorder %s29, 0
      %p250 = por %p248, %p249
      %s252 = sadd.s32 %s251, 1
      %p255 = scmp.eq.s32.totalorder %s23, 1
      %p256 = scmp.ne.s32.totalorder %s251, %s253
      %p257 = scmp.eq.s32.totalorder %s23, 0
      %p258 = por %p256, %p257
      %p259 = scmp.ne.s32.totalorder %s251, %s253
      %p260 = scmp.eq.s32.totalorder %s28, 1
      %p261 = por %p259, %p260
      %p262 = scmp.ne.s32.totalorder %s253, %s254
      %p263 = scmp.eq.s32.totalorder %s28, 0
      %p264 = por %p262, %p263
      %p265 = scmp.ne.s32.totalorder %s253, %s254
      %p266 = scmp.eq.s32.totalorder %s29, 1
      %p267 = por %p265, %p266
      %p269 = scmp.ne.s32.totalorder %s254, %s268
      %p270 = scmp.eq.s32.totalorder %s29, 0
      %p271 = por %p269, %p270
      %s273 = sadd.s32 %s272, 1
      %p276 = scmp.eq.s32.totalorder %s23, 1
      %p277 = scmp.ne.s32.totalorder %s272, %s274
      %p278 = scmp.eq.s32.totalorder %s23, 0
      %p279 = por %p277, %p278
      %p280 = scmp.ne.s32.totalorder %s272, %s274
      %p281 = scmp.eq.s32.totalorder %s28, 1
      %p282 = por %p280, %p281
      %p283 = scmp.ne.s32.totalorder %s274, %s275
      %p284 = scmp.eq.s32.totalorder %s28, 0
      %p285 = por %p283, %p284
      %p286 = scmp.ne.s32.totalorder %s274, %s275
      %p287 = scmp.eq.s32.totalorder %s29, 1
      %p288 = por %p286, %p287
      %p290 = scmp.ne.s32.totalorder %s275, %s289
      %p291 = scmp.eq.s32.totalorder %s29, 0
      %p292 = por %p290, %p291
      %s294 = sadd.s32 %s293, 1
      %p297 = scmp.eq.s32.totalorder %s23, 1
      %p298 = scmp.ne.s32.totalorder %s293, %s295
      %p299 = scmp.eq.s32.totalorder %s23, 0
      %p300 = por %p298, %p299
      %p301 = scmp.ne.s32.totalorder %s293, %s295
      %p302 = scmp.eq.s32.totalorder %s28, 1
      %p303 = por %p301, %p302
      %p304 = scmp.ne.s32.totalorder %s295, %s296
      %p305 = scmp.eq.s32.totalorder %s28, 0
      %p306 = por %p304, %p305
      %p307 = scmp.ne.s32.totalorder %s295, %s296
      %p308 = scmp.eq.s32.totalorder %s29, 1
      %p309 = por %p307, %p308
      %p311 = scmp.ne.s32.totalorder %s296, %s310
      %p312 = scmp.eq.s32.totalorder %s29, 0
      %p313 = por %p311, %p312
      %s314 = ssub.s32 %s23, %s30
      %p315 = scmp.eq.s32.totalorder %s314, 0
      %s317 = sadd.s32 %s316, 1
      %s318 = scalar_select %p315, %s316, %s317
      %p321 = pneg %p315
      %p322 = scmp.eq.s32.totalorder %s23, 1
      %p323 = por %p321, %p322
      %p324 = scmp.ne.s32.totalorder %s316, %s319
      %p325 = scmp.eq.s32.totalorder %s23, 0
      %p326 = por %p324, %p325
      %p327 = scmp.ne.s32.totalorder %s316, %s319
      %p328 = scmp.eq.s32.totalorder %s28, 1
      %p329 = por %p327, %p328
      %p330 = scmp.ne.s32.totalorder %s319, %s320
      %p331 = scmp.eq.s32.totalorder %s28, 0
      %p332 = por %p330, %p331
      %p333 = scmp.ne.s32.totalorder %s319, %s320
      %p334 = scmp.eq.s32.totalorder %s29, 1
      %p335 = por %p333, %p334
      %p337 = scmp.ne.s32.totalorder %s320, %s336
      %p338 = scmp.eq.s32.totalorder %s29, 0
      %p339 = por %p337, %p338
      %p340 = scmp.le.s32.totalorder 1, %s23
      %p341 = scmp.lt.s32.totalorder %s23, 3
      %p342 = pnand %p340, %p341
      %p343 = pneg %p342
      // Predicated region
      $region9: #{tpu_custom_call.1} parent=5 // pred_check
        _
      $region10: #{tpu_custom_call.1} parent=5 // pred_check_branch
        %345 = sbr.rel (%p342) target = $region12
      $region11: #{tpu_custom_call.1} parent=5 // pred_region
        %s346 = ssub.s32 %s23, 1
        // Predicated region
        $region13: #{tpu_custom_call.1} parent=11 // pred_check
          %p347 = pneg %p96
        $region14: #{tpu_custom_call.1} parent=11 // pred_check_branch
          %349 = sbr.rel (%p347) target = $region16
        $region15: #{tpu_custom_call.1} parent=11 // pred_region
          %351 = vsyncadd [#allocation3], 0
          %s352 = sshll.u32 %s2, 4
          %s353 = int_to_ptr.hbm [resolvable:$true] %s352
          %s354 = sshll.u32 [#allocation2], 4
          %s355 = int_to_ptr.vmem [resolvable:$true] %s354
          %360 = dma.hbm_to_vmem [thread:$0]  %s353, 4608, %s355, [#allocation3], 256, 256, 16
        $region16: #{tpu_custom_call.1} parent=11 // pred_fallthru
          _
        // Predicated region
        $region17: #{tpu_custom_call.1} parent=11 // pred_check
          %p361 = pneg %p117
        $region18: #{tpu_custom_call.1} parent=11 // pred_check_branch
          %363 = sbr.rel (%p361) target = $region20
        $region19: #{tpu_custom_call.1} parent=11 // pred_region
          _
        $region20: #{tpu_custom_call.1} parent=11 // pred_fallthru
          _
        // Predicated region
        $region21: #{tpu_custom_call.1} parent=11 // pred_check
          %p364 = pneg %p138
        $region22: #{tpu_custom_call.1} parent=11 // pred_check_branch
          %366 = sbr.rel (%p364) target = $region24
        $region23: #{tpu_custom_call.1} parent=11 // pred_region
          _
        $region24: #{tpu_custom_call.1} parent=11 // pred_fallthru
          _
        // Predicated region
        $region25: #{tpu_custom_call.1} parent=11 // pred_check
          %p367 = pneg %p159
        $region26: #{tpu_custom_call.1} parent=11 // pred_check_branch
          %369 = sbr.rel (%p367) target = $region28
        $region27: #{tpu_custom_call.1} parent=11 // pred_region
          _
        $region28: #{tpu_custom_call.1} parent=11 // pred_fallthru
          _
        // Predicated region
        $region29: #{tpu_custom_call.1} parent=11 // pred_check
          %p370 = pneg %p180
        $region30: #{tpu_custom_call.1} parent=11 // pred_check_branch
          %372 = sbr.rel (%p370) target = $region32
        $region31: #{tpu_custom_call.1} parent=11 // pred_region
          _
        $region32: #{tpu_custom_call.1} parent=11 // pred_fallthru
          _
        // Predicated region
        $region33: #{tpu_custom_call.1} parent=11 // pred_check
          %p373 = pneg %p201
        $region34: #{tpu_custom_call.1} parent=11 // pred_check_branch
          %375 = sbr.rel (%p373) target = $region36
        $region35: #{tpu_custom_call.1} parent=11 // pred_region
          _
        $region36: #{tpu_custom_call.1} parent=11 // pred_fallthru
          _
        // Predicated region
        $region37: #{tpu_custom_call.1} parent=11 // pred_check
          %p376 = pneg %p222
        $region38: #{tpu_custom_call.1} parent=11 // pred_check_branch
          %378 = sbr.rel (%p376) target = $region40
        $region39: #{tpu_custom_call.1} parent=11 // pred_region
          _
        $region40: #{tpu_custom_call.1} parent=11 // pred_fallthru
          _
        // Predicated region
        $region41: #{tpu_custom_call.1} parent=11 // pred_check
          %p379 = pneg %p243
        $region42: #{tpu_custom_call.1} parent=11 // pred_check_branch
          %381 = sbr.rel (%p379) target = $region44
        $region43: #{tpu_custom_call.1} parent=11 // pred_region
          _
        $region44: #{tpu_custom_call.1} parent=11 // pred_fallthru
          _
        // Predicated region
        $region45: #{tpu_custom_call.1} parent=11 // pred_check
          %p382 = pneg %p264
        $region46: #{tpu_custom_call.1} parent=11 // pred_check_branch
          %384 = sbr.rel (%p382) target = $region48
        $region47: #{tpu_custom_call.1} parent=11 // pred_region
          _
        $region48: #{tpu_custom_call.1} parent=11 // pred_fallthru
          _
        // Predicated region
        $region49: #{tpu_custom_call.1} parent=11 // pred_check
          %p385 = pneg %p285
        $region50: #{tpu_custom_call.1} parent=11 // pred_check_branch
          %387 = sbr.rel (%p385) target = $region52
        $region51: #{tpu_custom_call.1} parent=11 // pred_region
          _
        $region52: #{tpu_custom_call.1} parent=11 // pred_fallthru
          _
        // Predicated region
        $region53: #{tpu_custom_call.1} parent=11 // pred_check
          %p388 = pneg %p306
        $region54: #{tpu_custom_call.1} parent=11 // pred_check_branch
          %390 = sbr.rel (%p388) target = $region56
        $region55: #{tpu_custom_call.1} parent=11 // pred_region
          _
        $region56: #{tpu_custom_call.1} parent=11 // pred_fallthru
          _
      $region12: #{tpu_custom_call.1} parent=5 // pred_fallthru
        _
      %p391 = scmp.lt.s32.totalorder %s23, 2
      // Predicated region
      $region57: #{tpu_custom_call.1} parent=5 // pred_check
        %p392 = pneg %p391
      $region58: #{tpu_custom_call.1} parent=5 // pred_check_branch
        %394 = sbr.rel (%p392) target = $region60
      $region59: #{tpu_custom_call.1} parent=5 // pred_region
        // Predicated region
        $region61: #{tpu_custom_call.1} parent=59 // pred_check
          %p395 = pneg %p43
        $region62: #{tpu_custom_call.1} parent=59 // pred_check_branch
          %397 = sbr.rel (%p395) target = $region64
        $region63: #{tpu_custom_call.1} parent=59 // pred_region
          %p398 = scmp.lt.s32.totalorder %s23, 1
          %s399 = scalar_select %p398, %s23, 1
          %s400 = smul.addr %s399, 8
          %s401 = scalar_lea.vmem %s0, %s400
        $region64: #{tpu_custom_call.1} parent=59 // pred_fallthru
          _
        // Predicated region
        $region65: #{tpu_custom_call.1} parent=59 // pred_check
          %p402 = pneg %p69
        $region66: #{tpu_custom_call.1} parent=59 // pred_check_branch
          %404 = sbr.rel (%p402) target = $region68
        $region67: #{tpu_custom_call.1} parent=59 // pred_region
          %p405 = scmp.lt.s32.totalorder %s23, 1
          %s406 = scalar_select %p405, %s23, 1
          %s407 = smul.addr %s406, 8
          %s408 = scalar_lea.vmem %s1, %s407
        $region68: #{tpu_custom_call.1} parent=59 // pred_fallthru
          _
      $region60: #{tpu_custom_call.1} parent=5 // pred_fallthru
        _
      %p409 = scmp.le.s32.totalorder 1, %s23
      %p410 = scmp.lt.s32.totalorder %s23, 3
      %p411 = pnand %p409, %p410
      %p412 = pneg %p411
      // Predicated region
      $region69: #{tpu_custom_call.1} parent=5 // pred_check
        _
      $region70: #{tpu_custom_call.1} parent=5 // pred_check_branch
        %414 = sbr.rel (%p411) target = $region72
      $region71: #{tpu_custom_call.1} parent=5 // pred_region
        %s415 = ssub.s32 %s23, 1
        // Predicated region
        $region73: #{tpu_custom_call.1} parent=71 // pred_check
          %p416 = pneg %p96
        $region74: #{tpu_custom_call.1} parent=71 // pred_check_branch
          %418 = sbr.rel (%p416) target = $region76
        $region75: #{tpu_custom_call.1} parent=71 // pred_region
          %420 = dma.done [#allocation3], 4608
        $region76: #{tpu_custom_call.1} parent=71 // pred_fallthru
          _
        %p421 = scmp.lt.s32.totalorder %s28, 1
        %s422 = scalar_select %p421, %s28, 1
        %s423 = smul.addr %s422, 8
        %s424 = scalar_lea.vmem %s0, %s423
        %p425 = pneg %p49
        %p426 = pneg %p46
        %p427 = scmp.lt.s32.totalorder %s28, 1
        %s428 = scalar_select %p427, %s28, 1
        %s429 = smul.addr %s428, 8
        %s430 = scalar_lea.vmem %s1, %s429
        %p431 = pneg %p75
        %p432 = pneg %p72
        %p433 = pneg %p96
        %p434 = pneg %p93
        %p435 = pneg %p117
        %p436 = pneg %p114
        %p437 = pneg %p138
        %p438 = pneg %p135
        %p439 = pneg %p159
        %p440 = pneg %p156
        %p441 = pneg %p180
        %p442 = pneg %p177
        %p443 = pneg %p201
        %p444 = pneg %p198
        %p445 = pneg %p222
        %p446 = pneg %p219
        %p447 = pneg %p243
        %p448 = pneg %p240
        %p449 = pneg %p264
        %p450 = pneg %p261
        %p451 = pneg %p285
        %p452 = pneg %p282
        %p453 = pneg %p306
        %p454 = pneg %p303
        %p455 = pneg %p332
        %p456 = pneg %p329
        %s457 = sand.u32 %s319, 1
        %s458 = scalar_lea.sflag [#allocation4], %s457
        %s459 = sand.u32 %s319, 1
        %s460 = smul.addr %s459, 32
        %s461 = scalar_lea.vmem [#allocation5], %s460
        %p462 = scmp.lt.s32.totalorder %s28, 1
        %s463 = scalar_select %p462, %s28, 1
        %s464 = smul.addr %s463, 8
        %s465 = scalar_lea.vmem %s0, %s464
        %p466 = scmp.lt.s32.totalorder %s28, 1
        %s467 = scalar_select %p466, %s28, 1
        %s468 = smul.addr %s467, 8
        %s469 = scalar_lea.vmem %s1, %s468
        %s470 = smul.u32 2, %s28
        %v471 = vld [vmem:[%s3] sm:$0xff]
        %v472 = vld [vmem:[%s3 + $0x8] sm:$0xff]
        %v473 = vld [vmem:[%s3 + $0x10] sm:$0xff]
        %v474 = vld [vmem:[%s3 + $0x18] sm:$0xff]
        %v475 = vld [vmem:[%s465] sm:$0xff]
        %v476 = vld [vmem:[%s4] sm:$0xff]
        %v477 = vld [vmem:[%s4 + $0x8] sm:$0xff]
        %v478 = vld [vmem:[%s4 + $0x10] sm:$0xff]
        %v479 = vld [vmem:[%s4 + $0x18] sm:$0xff]
        %481 = vset.pattern.permute.xlu0 0
        %482 = vperm.xlu0 %481, %v476
        %v483 = vpop.permute.xlu0 %482
        %486 = vset.pattern.permute.xlu0 0
        %487 = vperm.xlu0 %486, %v477
        %v488 = vpop.permute.xlu0 %487
        %491 = vset.pattern.permute.xlu0 0
        %492 = vperm.xlu0 %491, %v478
        %v493 = vpop.permute.xlu0 %492
        %496 = vset.pattern.permute.xlu0 0
        %497 = vperm.xlu0 %496, %v479
        %v498 = vpop.permute.xlu0 %497
        %vm500 = vcmask 64512
        %v502 = vsel %vm500, %v471, 0
        %v505 = vsel %vm500, %v472, 0
        %v508 = vsel %vm500, %v473, 0
        %v511 = vsel %vm500, %v474, 0
        %513 = vmatpush.msra.mxu0 0.0
        %514 = vmatpush.msra.mxu0 0.0
        %515 = vmatpush.msra.mxu0 0.0
        %516 = vmatpush.msra.mxu0 0.0
        %517 = vmatpush.msra.mxu0 0.0
        %518 = vmatpush.msra.mxu0 0.0
        %519 = vmatpush.msra.mxu0 0.0
        %520 = vmatpush.msra.mxu0 0.0
        %521 = vmatpush.msra.mxu0 0.0
        %522 = vmatpush.msra.mxu0 0.0
        %523 = vmatpush.msra.mxu0 0.0
        %524 = vmatpush.msra.mxu0 0.0
        %525 = vmatpush.msra.mxu0 0.0
        %526 = vmatpush.msra.mxu0 0.0
        %527 = vmatpush.msra.mxu0 0.0
        %528 = vmatpush.msra.mxu0 %v475
        %529 = vmatmul.f32.gmra.mxu0 %v502
        %v530 = vpop.f32.mrf.mxu0
        %v531 = vadd.f32 %v483, %v530
        %532 = vmatmul.f32.gmra.mxu0 %v505
        %v533 = vpop.f32.mrf.mxu0
        %v534 = vadd.f32 %v488, %v533
        %535 = vmatmul.f32.gmra.mxu0 %v508
        %v536 = vpop.f32.mrf.mxu0
        %v537 = vadd.f32 %v493, %v536
        %538 = vmatmul.f32.gmra.mxu0 %v511
        %v539 = vpop.f32.mrf.mxu0
        %v540 = vadd.f32 %v498, %v539
        %541 = vdwg.mxu0
        %v542 = vmax.f32 %v531, 0.0
        %v543 = vmax.f32 %v534, 0.0
        %v544 = vmax.f32 %v537, 0.0
        %v545 = vmax.f32 %v540, 0.0
        %v546 = vld [vmem:[%s5] sm:$0xff]
        %v547 = vld [vmem:[%s5 + $0x8] sm:$0xff]
        %v548 = vld [vmem:[%s5 + $0x10] sm:$0xff]
        %v549 = vld [vmem:[%s6] sm:$0xff]
        %v550 = vld [vmem:[%s6 + $0x8] sm:$0xff]
        %v551 = vld [vmem:[%s6 + $0x10] sm:$0xff]
        %553 = vset.pattern.permute.xlu0 0
        %554 = vperm.xlu0 %553, %v549
        %v555 = vpop.permute.xlu0 %554
        %558 = vset.pattern.permute.xlu0 0
        %559 = vperm.xlu0 %558, %v550
        %v560 = vpop.permute.xlu0 %559
        %563 = vset.pattern.permute.xlu0 0
        %564 = vperm.xlu0 %563, %v551
        %v565 = vpop.permute.xlu0 %564
        %vm567 = vcmask 261120
        %v569 = vsel %vm567, %v546, 0
        %v572 = vsel %vm567, %v547, 0
        %v575 = vsel %vm567, %v548, 0
        %577 = vmatpush.msra.mxu0 0.0
        %578 = vmatpush.msra.mxu0 0.0
        %579 = vmatpush.msra.mxu0 0.0
        %580 = vmatpush.msra.mxu0 0.0
        %581 = vmatpush.msra.mxu0 0.0
        %582 = vmatpush.msra.mxu0 0.0
        %583 = vmatpush.msra.mxu0 0.0
        %584 = vmatpush.msra.mxu0 0.0
        %585 = vmatpush.msra.mxu0 0.0
        %586 = vmatpush.msra.mxu0 0.0
        %587 = vmatpush.msra.mxu0 0.0
        %588 = vmatpush.msra.mxu0 0.0
        %589 = vmatpush.msra.mxu0 %v545
        %590 = vmatpush.msra.mxu0 %v544
        %591 = vmatpush.msra.mxu0 %v543
        %592 = vmatpush.msra.mxu0 %v542
        %593 = vmatmul.f32.gmra.mxu0 %v569
        %v594 = vpop.f32.mrf.mxu0
        %v595 = vadd.f32 %v555, %v594
        %596 = vmatmul.f32.gmra.mxu0 %v572
        %v597 = vpop.f32.mrf.mxu0
        %v598 = vadd.f32 %v560, %v597
        %599 = vmatmul.f32.gmra.mxu0 %v575
        %v600 = vpop.f32.mrf.mxu0
        %v601 = vadd.f32 %v565, %v600
        %602 = vdwg.mxu0
        %v603 = vrot.slane %v595, 4
        %v604 = vmax.f32 %v595, %v603
        %v605 = vrot.slane %v604, 2
        %v606 = vmax.f32 %v604, %v605
        %v607 = vrot.slane %v606, 1
        %v608 = vmax.f32 %v606, %v607
        %v609 = vsub.f32 %v595, %v608
        %v610 = vmul.f32 %v609, 1.442695
        %v611 = vpow.pop %v610
        %v612 = vrot.slane %v611, 4
        %v613 = vadd.f32 %v611, %v612
        %v614 = vrot.slane %v613, 2
        %v615 = vadd.f32 %v613, %v614
        %v616 = vrot.slane %v615, 1
        %v617 = vadd.f32 %v615, %v616
        %v618 = vrcp.pop %v617
        %v619 = vmul.f32 %v617, %v618
        %v620 = vsub.f32 1.0, %v619
        %v621 = vmul.f32 %v618, %v620
        %v622 = vadd.f32 %v618, %v621
        %vm623 = vweird.f32 %v617
        %vm624 = vweird.f32 %v618
        %vm625 = vmor %vm623, %vm624
        %v626 = vsel %vm625, %v618, %v622
        %v627 = vand.u32 2147483647, %v617
        %vm628 = vcmp.eq.f32.partialorder %v627, 8.507059e+37
        %v629 = vand.u32 %v617, 2147483648
        %v630 = vor.u32 1.1754944e-38, %v629
        %v631 = vsel %vm628, %v630, %v626
        %v632 = vmul.f32 %v611, %v631
        %v633 = vld [vmem:[%s469] sm:$0xff]
        %v634 = vlaneseq
        %v635 = vshrl.u32 %v634, 7
        %v636 = vadd.s32 %v635, 8
        %v637 = vadd.s32 %v635, 16
        %v638 = vadd.s32 %v635, 24
        %v639 = vadd.s32 %v635, 32
        %v640 = vadd.s32 %v635, 40
        %v641 = vadd.s32 %v635, 48
        %v642 = vadd.s32 %v635, 56
        %v643 = vadd.s32 %v635, 64
        %v644 = vadd.s32 %v635, 72
        %v645 = vadd.s32 %v635, 80
        %v646 = vadd.s32 %v635, 88
        %v647 = vadd.s32 %v635, 96
        %v648 = vadd.s32 %v635, 104
        %v649 = vadd.s32 %v635, 112
        %v650 = vadd.s32 %v635, 120
        %v651 = vadd.s32 %v635, 128
        %v652 = vadd.s32 %v635, 136
        %v653 = vadd.s32 %v635, 144
        %v654 = vadd.s32 %v635, 152
        %v655 = vadd.s32 %v635, 160
        %v656 = vadd.s32 %v635, 168
        %v657 = vadd.s32 %v635, 176
        %v658 = vadd.s32 %v635, 184
        %v659 = vadd.s32 %v635, 192
        %v660 = vadd.s32 %v635, 200
        %v661 = vadd.s32 %v635, 208
        %v662 = vadd.s32 %v635, 216
        %v663 = vadd.s32 %v635, 224
        %v664 = vadd.s32 %v635, 232
        %v665 = vadd.s32 %v635, 240
        %v666 = vadd.s32 %v635, 248
        %v667 = vperm.slane %v633, 0
        %vm668 = vcmp.eq.s32.totalorder %v635, %v667
        %vm669 = vcmp.eq.s32.totalorder %v636, %v667
        %vm670 = vcmp.eq.s32.totalorder %v637, %v667
        %vm671 = vcmp.eq.s32.totalorder %v638, %v667
        %vm672 = vcmp.eq.s32.totalorder %v639, %v667
        %vm673 = vcmp.eq.s32.totalorder %v640, %v667
        %vm674 = vcmp.eq.s32.totalorder %v641, %v667
        %vm675 = vcmp.eq.s32.totalorder %v642, %v667
        %vm676 = vcmp.eq.s32.totalorder %v643, %v667
        %vm677 = vcmp.eq.s32.totalorder %v644, %v667
        %vm678 = vcmp.eq.s32.totalorder %v645, %v667
        %vm679 = vcmp.eq.s32.totalorder %v646, %v667
        %vm680 = vcmp.eq.s32.totalorder %v647, %v667
        %vm681 = vcmp.eq.s32.totalorder %v648, %v667
        %vm682 = vcmp.eq.s32.totalorder %v649, %v667
        %vm683 = vcmp.eq.s32.totalorder %v650, %v667
        %vm684 = vcmp.eq.s32.totalorder %v651, %v667
        %vm685 = vcmp.eq.s32.totalorder %v652, %v667
        %vm686 = vcmp.eq.s32.totalorder %v653, %v667
        %vm687 = vcmp.eq.s32.totalorder %v654, %v667
        %vm688 = vcmp.eq.s32.totalorder %v655, %v667
        %vm689 = vcmp.eq.s32.totalorder %v656, %v667
        %vm690 = vcmp.eq.s32.totalorder %v657, %v667
        %vm691 = vcmp.eq.s32.totalorder %v658, %v667
        %vm692 = vcmp.eq.s32.totalorder %v659, %v667
        %vm693 = vcmp.eq.s32.totalorder %v660, %v667
        %vm694 = vcmp.eq.s32.totalorder %v661, %v667
        %vm695 = vcmp.eq.s32.totalorder %v662, %v667
        %vm696 = vcmp.eq.s32.totalorder %v663, %v667
        %vm697 = vcmp.eq.s32.totalorder %v664, %v667
        %vm698 = vcmp.eq.s32.totalorder %v665, %v667
        %vm699 = vcmp.eq.s32.totalorder %v666, %v667
        %v700 = vperm.slane %v632, 0
        %v701 = vsel %vm668, %v700, 0.0
        %v702 = vsel %vm669, %v700, 0.0
        %v703 = vsel %vm670, %v700, 0.0
        %v704 = vsel %vm671, %v700, 0.0
        %v705 = vsel %vm672, %v700, 0.0
        %v706 = vsel %vm673, %v700, 0.0
        %v707 = vsel %vm674, %v700, 0.0
        %v708 = vsel %vm675, %v700, 0.0
        %v709 = vsel %vm676, %v700, 0.0
        %v710 = vsel %vm677, %v700, 0.0
        %v711 = vsel %vm678, %v700, 0.0
        %v712 = vsel %vm679, %v700, 0.0
        %v713 = vsel %vm680, %v700, 0.0
        %v714 = vsel %vm681, %v700, 0.0
        %v715 = vsel %vm682, %v700, 0.0
        %v716 = vsel %vm683, %v700, 0.0
        %v717 = vsel %vm684, %v700, 0.0
        %v718 = vsel %vm685, %v700, 0.0
        %v719 = vsel %vm686, %v700, 0.0
        %v720 = vsel %vm687, %v700, 0.0
        %v721 = vsel %vm688, %v700, 0.0
        %v722 = vsel %vm689, %v700, 0.0
        %v723 = vsel %vm690, %v700, 0.0
        %v724 = vsel %vm691, %v700, 0.0
        %v725 = vsel %vm692, %v700, 0.0
        %v726 = vsel %vm693, %v700, 0.0
        %v727 = vsel %vm694, %v700, 0.0
        %v728 = vsel %vm695, %v700, 0.0
        %v729 = vsel %vm696, %v700, 0.0
        %v730 = vsel %vm697, %v700, 0.0
        %v731 = vsel %vm698, %v700, 0.0
        %v732 = vsel %vm699, %v700, 0.0
        %v733 = vadd.f32 %v701, 0.0
        %v734 = vadd.f32 %v702, 0.0
        %v735 = vadd.f32 %v703, 0.0
        %v736 = vadd.f32 %v704, 0.0
        %v737 = vadd.f32 %v705, 0.0
        %v738 = vadd.f32 %v706, 0.0
        %v739 = vadd.f32 %v707, 0.0
        %v740 = vadd.f32 %v708, 0.0
        %v741 = vadd.f32 %v709, 0.0
        %v742 = vadd.f32 %v710, 0.0
        %v743 = vadd.f32 %v711, 0.0
        %v744 = vadd.f32 %v712, 0.0
        %v745 = vadd.f32 %v713, 0.0
        %v746 = vadd.f32 %v714, 0.0
        %v747 = vadd.f32 %v715, 0.0
        %v748 = vadd.f32 %v716, 0.0
        %v749 = vadd.f32 %v717, 0.0
        %v750 = vadd.f32 %v718, 0.0
        %v751 = vadd.f32 %v719, 0.0
        %v752 = vadd.f32 %v720, 0.0
        %v753 = vadd.f32 %v721, 0.0
        %v754 = vadd.f32 %v722, 0.0
        %v755 = vadd.f32 %v723, 0.0
        %v756 = vadd.f32 %v724, 0.0
        %v757 = vadd.f32 %v725, 0.0
        %v758 = vadd.f32 %v726, 0.0
        %v759 = vadd.f32 %v727, 0.0
        %v760 = vadd.f32 %v728, 0.0
        %v761 = vadd.f32 %v729, 0.0
        %v762 = vadd.f32 %v730, 0.0
        %v763 = vadd.f32 %v731, 0.0
        %v764 = vadd.f32 %v732, 0.0
        %v765 = vperm.slane %v633, 1
        %vm766 = vcmp.eq.s32.totalorder %v635, %v765
        %vm767 = vcmp.eq.s32.totalorder %v636, %v765
        %vm768 = vcmp.eq.s32.totalorder %v637, %v765
        %vm769 = vcmp.eq.s32.totalorder %v638, %v765
        %vm770 = vcmp.eq.s32.totalorder %v639, %v765
        %vm771 = vcmp.eq.s32.totalorder %v640, %v765
        %vm772 = vcmp.eq.s32.totalorder %v641, %v765
        %vm773 = vcmp.eq.s32.totalorder %v642, %v765
        %vm774 = vcmp.eq.s32.totalorder %v643, %v765
        %vm775 = vcmp.eq.s32.totalorder %v644, %v765
        %vm776 = vcmp.eq.s32.totalorder %v645, %v765
        %vm777 = vcmp.eq.s32.totalorder %v646, %v765
        %vm778 = vcmp.eq.s32.totalorder %v647, %v765
        %vm779 = vcmp.eq.s32.totalorder %v648, %v765
        %vm780 = vcmp.eq.s32.totalorder %v649, %v765
        %vm781 = vcmp.eq.s32.totalorder %v650, %v765
        %vm782 = vcmp.eq.s32.totalorder %v651, %v765
        %vm783 = vcmp.eq.s32.totalorder %v652, %v765
        %vm784 = vcmp.eq.s32.totalorder %v653, %v765
        %vm785 = vcmp.eq.s32.totalorder %v654, %v765
        %vm786 = vcmp.eq.s32.totalorder %v655, %v765
        %vm787 = vcmp.eq.s32.totalorder %v656, %v765
        %vm788 = vcmp.eq.s32.totalorder %v657, %v765
        %vm789 = vcmp.eq.s32.totalorder %v658, %v765
        %vm790 = vcmp.eq.s32.totalorder %v659, %v765
        %vm791 = vcmp.eq.s32.totalorder %v660, %v765
        %vm792 = vcmp.eq.s32.totalorder %v661, %v765
        %vm793 = vcmp.eq.s32.totalorder %v662, %v765
        %vm794 = vcmp.eq.s32.totalorder %v663, %v765
        %vm795 = vcmp.eq.s32.totalorder %v664, %v765
        %vm796 = vcmp.eq.s32.totalorder %v665, %v765
        %vm797 = vcmp.eq.s32.totalorder %v666, %v765
        %v798 = vperm.slane %v632, 1
        %v799 = vsel %vm766, %v798, 0.0
        %v800 = vsel %vm767, %v798, 0.0
        %v801 = vsel %vm768, %v798, 0.0
        %v802 = vsel %vm769, %v798, 0.0
        %v803 = vsel %vm770, %v798, 0.0
        %v804 = vsel %vm771, %v798, 0.0
        %v805 = vsel %vm772, %v798, 0.0
        %v806 = vsel %vm773, %v798, 0.0
        %v807 = vsel %vm774, %v798, 0.0
        %v808 = vsel %vm775, %v798, 0.0
        %v809 = vsel %vm776, %v798, 0.0
        %v810 = vsel %vm777, %v798, 0.0
        %v811 = vsel %vm778, %v798, 0.0
        %v812 = vsel %vm779, %v798, 0.0
        %v813 = vsel %vm780, %v798, 0.0
        %v814 = vsel %vm781, %v798, 0.0
        %v815 = vsel %vm782, %v798, 0.0
        %v816 = vsel %vm783, %v798, 0.0
        %v817 = vsel %vm784, %v798, 0.0
        %v818 = vsel %vm785, %v798, 0.0
        %v819 = vsel %vm786, %v798, 0.0
        %v820 = vsel %vm787, %v798, 0.0
        %v821 = vsel %vm788, %v798, 0.0
        %v822 = vsel %vm789, %v798, 0.0
        %v823 = vsel %vm790, %v798, 0.0
        %v824 = vsel %vm791, %v798, 0.0
        %v825 = vsel %vm792, %v798, 0.0
        %v826 = vsel %vm793, %v798, 0.0
        %v827 = vsel %vm794, %v798, 0.0
        %v828 = vsel %vm795, %v798, 0.0
        %v829 = vsel %vm796, %v798, 0.0
        %v830 = vsel %vm797, %v798, 0.0
        %v831 = vadd.f32 %v733, %v799
        %v832 = vadd.f32 %v734, %v800
        %v833 = vadd.f32 %v735, %v801
        %v834 = vadd.f32 %v736, %v802
        %v835 = vadd.f32 %v737, %v803
        %v836 = vadd.f32 %v738, %v804
        %v837 = vadd.f32 %v739, %v805
        %v838 = vadd.f32 %v740, %v806
        %v839 = vadd.f32 %v741, %v807
        %v840 = vadd.f32 %v742, %v808
        %v841 = vadd.f32 %v743, %v809
        %v842 = vadd.f32 %v744, %v810
        %v843 = vadd.f32 %v745, %v811
        %v844 = vadd.f32 %v746, %v812
        %v845 = vadd.f32 %v747, %v813
        %v846 = vadd.f32 %v748, %v814
        %v847 = vadd.f32 %v749, %v815
        %v848 = vadd.f32 %v750, %v816
        %v849 = vadd.f32 %v751, %v817
        %v850 = vadd.f32 %v752, %v818
        %v851 = vadd.f32 %v753, %v819
        %v852 = vadd.f32 %v754, %v820
        %v853 = vadd.f32 %v755, %v821
        %v854 = vadd.f32 %v756, %v822
        %v855 = vadd.f32 %v757, %v823
        %v856 = vadd.f32 %v758, %v824
        %v857 = vadd.f32 %v759, %v825
        %v858 = vadd.f32 %v760, %v826
        %v859 = vadd.f32 %v761, %v827
        %v860 = vadd.f32 %v762, %v828
        %v861 = vadd.f32 %v763, %v829
        %v862 = vadd.f32 %v764, %v830
        %v863 = vperm.slane %v633, 2
        %vm864 = vcmp.eq.s32.totalorder %v635, %v863
        %vm865 = vcmp.eq.s32.totalorder %v636, %v863
        %vm866 = vcmp.eq.s32.totalorder %v637, %v863
        %vm867 = vcmp.eq.s32.totalorder %v638, %v863
        %vm868 = vcmp.eq.s32.totalorder %v639, %v863
        %vm869 = vcmp.eq.s32.totalorder %v640, %v863
        %vm870 = vcmp.eq.s32.totalorder %v641, %v863
        %vm871 = vcmp.eq.s32.totalorder %v642, %v863
        %vm872 = vcmp.eq.s32.totalorder %v643, %v863
        %vm873 = vcmp.eq.s32.totalorder %v644, %v863
        %vm874 = vcmp.eq.s32.totalorder %v645, %v863
        %vm875 = vcmp.eq.s32.totalorder %v646, %v863
        %vm876 = vcmp.eq.s32.totalorder %v647, %v863
        %vm877 = vcmp.eq.s32.totalorder %v648, %v863
        %vm878 = vcmp.eq.s32.totalorder %v649, %v863
        %vm879 = vcmp.eq.s32.totalorder %v650, %v863
        %vm880 = vcmp.eq.s32.totalorder %v651, %v863
        %vm881 = vcmp.eq.s32.totalorder %v652, %v863
        %vm882 = vcmp.eq.s32.totalorder %v653, %v863
        %vm883 = vcmp.eq.s32.totalorder %v654, %v863
        %vm884 = vcmp.eq.s32.totalorder %v655, %v863
        %vm885 = vcmp.eq.s32.totalorder %v656, %v863
        %vm886 = vcmp.eq.s32.totalorder %v657, %v863
        %vm887 = vcmp.eq.s32.totalorder %v658, %v863
        %vm888 = vcmp.eq.s32.totalorder %v659, %v863
        %vm889 = vcmp.eq.s32.totalorder %v660, %v863
        %vm890 = vcmp.eq.s32.totalorder %v661, %v863
        %vm891 = vcmp.eq.s32.totalorder %v662, %v863
        %vm892 = vcmp.eq.s32.totalorder %v663, %v863
        %vm893 = vcmp.eq.s32.totalorder %v664, %v863
        %vm894 = vcmp.eq.s32.totalorder %v665, %v863
        %vm895 = vcmp.eq.s32.totalorder %v666, %v863
        %v896 = vperm.slane %v632, 2
        %v897 = vsel %vm864, %v896, 0.0
        %v898 = vsel %vm865, %v896, 0.0
        %v899 = vsel %vm866, %v896, 0.0
        %v900 = vsel %vm867, %v896, 0.0
        %v901 = vsel %vm868, %v896, 0.0
        %v902 = vsel %vm869, %v896, 0.0
        %v903 = vsel %vm870, %v896, 0.0
        %v904 = vsel %vm871, %v896, 0.0
        %v905 = vsel %vm872, %v896, 0.0
        %v906 = vsel %vm873, %v896, 0.0
        %v907 = vsel %vm874, %v896, 0.0
        %v908 = vsel %vm875, %v896, 0.0
        %v909 = vsel %vm876, %v896, 0.0
        %v910 = vsel %vm877, %v896, 0.0
        %v911 = vsel %vm878, %v896, 0.0
        %v912 = vsel %vm879, %v896, 0.0
        %v913 = vsel %vm880, %v896, 0.0
        %v914 = vsel %vm881, %v896, 0.0
        %v915 = vsel %vm882, %v896, 0.0
        %v916 = vsel %vm883, %v896, 0.0
        %v917 = vsel %vm884, %v896, 0.0
        %v918 = vsel %vm885, %v896, 0.0
        %v919 = vsel %vm886, %v896, 0.0
        %v920 = vsel %vm887, %v896, 0.0
        %v921 = vsel %vm888, %v896, 0.0
        %v922 = vsel %vm889, %v896, 0.0
        %v923 = vsel %vm890, %v896, 0.0
        %v924 = vsel %vm891, %v896, 0.0
        %v925 = vsel %vm892, %v896, 0.0
        %v926 = vsel %vm893, %v896, 0.0
        %v927 = vsel %vm894, %v896, 0.0
        %v928 = vsel %vm895, %v896, 0.0
        %v929 = vadd.f32 %v831, %v897
        %v930 = vadd.f32 %v832, %v898
        %v931 = vadd.f32 %v833, %v899
        %v932 = vadd.f32 %v834, %v900
        %v933 = vadd.f32 %v835, %v901
        %v934 = vadd.f32 %v836, %v902
        %v935 = vadd.f32 %v837, %v903
        %v936 = vadd.f32 %v838, %v904
        %v937 = vadd.f32 %v839, %v905
        %v938 = vadd.f32 %v840, %v906
        %v939 = vadd.f32 %v841, %v907
        %v940 = vadd.f32 %v842, %v908
        %v941 = vadd.f32 %v843, %v909
        %v942 = vadd.f32 %v844, %v910
        %v943 = vadd.f32 %v845, %v911
        %v944 = vadd.f32 %v846, %v912
        %v945 = vadd.f32 %v847, %v913
        %v946 = vadd.f32 %v848, %v914
        %v947 = vadd.f32 %v849, %v915
        %v948 = vadd.f32 %v850, %v916
        %v949 = vadd.f32 %v851, %v917
        %v950 = vadd.f32 %v852, %v918
        %v951 = vadd.f32 %v853, %v919
        %v952 = vadd.f32 %v854, %v920
        %v953 = vadd.f32 %v855, %v921
        %v954 = vadd.f32 %v856, %v922
        %v955 = vadd.f32 %v857, %v923
        %v956 = vadd.f32 %v858, %v924
        %v957 = vadd.f32 %v859, %v925
        %v958 = vadd.f32 %v860, %v926
        %v959 = vadd.f32 %v861, %v927
        %v960 = vadd.f32 %v862, %v928
        %v961 = vperm.slane %v633, 3
        %vm962 = vcmp.eq.s32.totalorder %v635, %v961
        %vm963 = vcmp.eq.s32.totalorder %v636, %v961
        %vm964 = vcmp.eq.s32.totalorder %v637, %v961
        %vm965 = vcmp.eq.s32.totalorder %v638, %v961
        %vm966 = vcmp.eq.s32.totalorder %v639, %v961
        %vm967 = vcmp.eq.s32.totalorder %v640, %v961
        %vm968 = vcmp.eq.s32.totalorder %v641, %v961
        %vm969 = vcmp.eq.s32.totalorder %v642, %v961
        %vm970 = vcmp.eq.s32.totalorder %v643, %v961
        %vm971 = vcmp.eq.s32.totalorder %v644, %v961
        %vm972 = vcmp.eq.s32.totalorder %v645, %v961
        %vm973 = vcmp.eq.s32.totalorder %v646, %v961
        %vm974 = vcmp.eq.s32.totalorder %v647, %v961
        %vm975 = vcmp.eq.s32.totalorder %v648, %v961
        %vm976 = vcmp.eq.s32.totalorder %v649, %v961
        %vm977 = vcmp.eq.s32.totalorder %v650, %v961
        %vm978 = vcmp.eq.s32.totalorder %v651, %v961
        %vm979 = vcmp.eq.s32.totalorder %v652, %v961
        %vm980 = vcmp.eq.s32.totalorder %v653, %v961
        %vm981 = vcmp.eq.s32.totalorder %v654, %v961
        %vm982 = vcmp.eq.s32.totalorder %v655, %v961
        %vm983 = vcmp.eq.s32.totalorder %v656, %v961
        %vm984 = vcmp.eq.s32.totalorder %v657, %v961
        %vm985 = vcmp.eq.s32.totalorder %v658, %v961
        %vm986 = vcmp.eq.s32.totalorder %v659, %v961
        %vm987 = vcmp.eq.s32.totalorder %v660, %v961
        %vm988 = vcmp.eq.s32.totalorder %v661, %v961
        %vm989 = vcmp.eq.s32.totalorder %v662, %v961
        %vm990 = vcmp.eq.s32.totalorder %v663, %v961
        %vm991 = vcmp.eq.s32.totalorder %v664, %v961
        %vm992 = vcmp.eq.s32.totalorder %v665, %v961
        %vm993 = vcmp.eq.s32.totalorder %v666, %v961
        %v994 = vperm.slane %v632, 3
        %v995 = vsel %vm962, %v994, 0.0
        %v996 = vsel %vm963, %v994, 0.0
        %v997 = vsel %vm964, %v994, 0.0
        %v998 = vsel %vm965, %v994, 0.0
        %v999 = vsel %vm966, %v994, 0.0
        %v1000 = vsel %vm967, %v994, 0.0
        %v1001 = vsel %vm968, %v994, 0.0
        %v1002 = vsel %vm969, %v994, 0.0
        %v1003 = vsel %vm970, %v994, 0.0
        %v1004 = vsel %vm971, %v994, 0.0
        %v1005 = vsel %vm972, %v994, 0.0
        %v1006 = vsel %vm973, %v994, 0.0
        %v1007 = vsel %vm974, %v994, 0.0
        %v1008 = vsel %vm975, %v994, 0.0
        %v1009 = vsel %vm976, %v994, 0.0
        %v1010 = vsel %vm977, %v994, 0.0
        %v1011 = vsel %vm978, %v994, 0.0
        %v1012 = vsel %vm979, %v994, 0.0
        %v1013 = vsel %vm980, %v994, 0.0
        %v1014 = vsel %vm981, %v994, 0.0
        %v1015 = vsel %vm982, %v994, 0.0
        %v1016 = vsel %vm983, %v994, 0.0
        %v1017 = vsel %vm984, %v994, 0.0
        %v1018 = vsel %vm985, %v994, 0.0
        %v1019 = vsel %vm986, %v994, 0.0
        %v1020 = vsel %vm987, %v994, 0.0
        %v1021 = vsel %vm988, %v994, 0.0
        %v1022 = vsel %vm989, %v994, 0.0
        %v1023 = vsel %vm990, %v994, 0.0
        %v1024 = vsel %vm991, %v994, 0.0
        %v1025 = vsel %vm992, %v994, 0.0
        %v1026 = vsel %vm993, %v994, 0.0
        %v1027 = vadd.f32 %v929, %v995
        %v1028 = vadd.f32 %v930, %v996
        %v1029 = vadd.f32 %v931, %v997
        %v1030 = vadd.f32 %v932, %v998
        %v1031 = vadd.f32 %v933, %v999
        %v1032 = vadd.f32 %v934, %v1000
        %v1033 = vadd.f32 %v935, %v1001
        %v1034 = vadd.f32 %v936, %v1002
        %v1035 = vadd.f32 %v937, %v1003
        %v1036 = vadd.f32 %v938, %v1004
        %v1037 = vadd.f32 %v939, %v1005
        %v1038 = vadd.f32 %v940, %v1006
        %v1039 = vadd.f32 %v941, %v1007
        %v1040 = vadd.f32 %v942, %v1008
        %v1041 = vadd.f32 %v943, %v1009
        %v1042 = vadd.f32 %v944, %v1010
        %v1043 = vadd.f32 %v945, %v1011
        %v1044 = vadd.f32 %v946, %v1012
        %v1045 = vadd.f32 %v947, %v1013
        %v1046 = vadd.f32 %v948, %v1014
        %v1047 = vadd.f32 %v949, %v1015
        %v1048 = vadd.f32 %v950, %v1016
        %v1049 = vadd.f32 %v951, %v1017
        %v1050 = vadd.f32 %v952, %v1018
        %v1051 = vadd.f32 %v953, %v1019
        %v1052 = vadd.f32 %v954, %v1020
        %v1053 = vadd.f32 %v955, %v1021
        %v1054 = vadd.f32 %v956, %v1022
        %v1055 = vadd.f32 %v957, %v1023
        %v1056 = vadd.f32 %v958, %v1024
        %v1057 = vadd.f32 %v959, %v1025
        %v1058 = vadd.f32 %v960, %v1026
        %v1059 = vperm.slane %v633, 4
        %vm1060 = vcmp.eq.s32.totalorder %v635, %v1059
        %vm1061 = vcmp.eq.s32.totalorder %v636, %v1059
        %vm1062 = vcmp.eq.s32.totalorder %v637, %v1059
        %vm1063 = vcmp.eq.s32.totalorder %v638, %v1059
        %vm1064 = vcmp.eq.s32.totalorder %v639, %v1059
        %vm1065 = vcmp.eq.s32.totalorder %v640, %v1059
        %vm1066 = vcmp.eq.s32.totalorder %v641, %v1059
        %vm1067 = vcmp.eq.s32.totalorder %v642, %v1059
        %vm1068 = vcmp.eq.s32.totalorder %v643, %v1059
        %vm1069 = vcmp.eq.s32.totalorder %v644, %v1059
        %vm1070 = vcmp.eq.s32.totalorder %v645, %v1059
        %vm1071 = vcmp.eq.s32.totalorder %v646, %v1059
        %vm1072 = vcmp.eq.s32.totalorder %v647, %v1059
        %vm1073 = vcmp.eq.s32.totalorder %v648, %v1059
        %vm1074 = vcmp.eq.s32.totalorder %v649, %v1059
        %vm1075 = vcmp.eq.s32.totalorder %v650, %v1059
        %vm1076 = vcmp.eq.s32.totalorder %v651, %v1059
        %vm1077 = vcmp.eq.s32.totalorder %v652, %v1059
        %vm1078 = vcmp.eq.s32.totalorder %v653, %v1059
        %vm1079 = vcmp.eq.s32.totalorder %v654, %v1059
        %vm1080 = vcmp.eq.s32.totalorder %v655, %v1059
        %vm1081 = vcmp.eq.s32.totalorder %v656, %v1059
        %vm1082 = vcmp.eq.s32.totalorder %v657, %v1059
        %vm1083 = vcmp.eq.s32.totalorder %v658, %v1059
        %vm1084 = vcmp.eq.s32.totalorder %v659, %v1059
        %vm1085 = vcmp.eq.s32.totalorder %v660, %v1059
        %vm1086 = vcmp.eq.s32.totalorder %v661, %v1059
        %vm1087 = vcmp.eq.s32.totalorder %v662, %v1059
        %vm1088 = vcmp.eq.s32.totalorder %v663, %v1059
        %vm1089 = vcmp.eq.s32.totalorder %v664, %v1059
        %vm1090 = vcmp.eq.s32.totalorder %v665, %v1059
        %vm1091 = vcmp.eq.s32.totalorder %v666, %v1059
        %v1092 = vperm.slane %v632, 4
        %v1093 = vsel %vm1060, %v1092, 0.0
        %v1094 = vsel %vm1061, %v1092, 0.0
        %v1095 = vsel %vm1062, %v1092, 0.0
        %v1096 = vsel %vm1063, %v1092, 0.0
        %v1097 = vsel %vm1064, %v1092, 0.0
        %v1098 = vsel %vm1065, %v1092, 0.0
        %v1099 = vsel %vm1066, %v1092, 0.0
        %v1100 = vsel %vm1067, %v1092, 0.0
        %v1101 = vsel %vm1068, %v1092, 0.0
        %v1102 = vsel %vm1069, %v1092, 0.0
        %v1103 = vsel %vm1070, %v1092, 0.0
        %v1104 = vsel %vm1071, %v1092, 0.0
        %v1105 = vsel %vm1072, %v1092, 0.0
        %v1106 = vsel %vm1073, %v1092, 0.0
        %v1107 = vsel %vm1074, %v1092, 0.0
        %v1108 = vsel %vm1075, %v1092, 0.0
        %v1109 = vsel %vm1076, %v1092, 0.0
        %v1110 = vsel %vm1077, %v1092, 0.0
        %v1111 = vsel %vm1078, %v1092, 0.0
        %v1112 = vsel %vm1079, %v1092, 0.0
        %v1113 = vsel %vm1080, %v1092, 0.0
        %v1114 = vsel %vm1081, %v1092, 0.0
        %v1115 = vsel %vm1082, %v1092, 0.0
        %v1116 = vsel %vm1083, %v1092, 0.0
        %v1117 = vsel %vm1084, %v1092, 0.0
        %v1118 = vsel %vm1085, %v1092, 0.0
        %v1119 = vsel %vm1086, %v1092, 0.0
        %v1120 = vsel %vm1087, %v1092, 0.0
        %v1121 = vsel %vm1088, %v1092, 0.0
        %v1122 = vsel %vm1089, %v1092, 0.0
        %v1123 = vsel %vm1090, %v1092, 0.0
        %v1124 = vsel %vm1091, %v1092, 0.0
        %v1125 = vadd.f32 %v1027, %v1093
        %v1126 = vadd.f32 %v1028, %v1094
        %v1127 = vadd.f32 %v1029, %v1095
        %v1128 = vadd.f32 %v1030, %v1096
        %v1129 = vadd.f32 %v1031, %v1097
        %v1130 = vadd.f32 %v1032, %v1098
        %v1131 = vadd.f32 %v1033, %v1099
        %v1132 = vadd.f32 %v1034, %v1100
        %v1133 = vadd.f32 %v1035, %v1101
        %v1134 = vadd.f32 %v1036, %v1102
        %v1135 = vadd.f32 %v1037, %v1103
        %v1136 = vadd.f32 %v1038, %v1104
        %v1137 = vadd.f32 %v1039, %v1105
        %v1138 = vadd.f32 %v1040, %v1106
        %v1139 = vadd.f32 %v1041, %v1107
        %v1140 = vadd.f32 %v1042, %v1108
        %v1141 = vadd.f32 %v1043, %v1109
        %v1142 = vadd.f32 %v1044, %v1110
        %v1143 = vadd.f32 %v1045, %v1111
        %v1144 = vadd.f32 %v1046, %v1112
        %v1145 = vadd.f32 %v1047, %v1113
        %v1146 = vadd.f32 %v1048, %v1114
        %v1147 = vadd.f32 %v1049, %v1115
        %v1148 = vadd.f32 %v1050, %v1116
        %v1149 = vadd.f32 %v1051, %v1117
        %v1150 = vadd.f32 %v1052, %v1118
        %v1151 = vadd.f32 %v1053, %v1119
        %v1152 = vadd.f32 %v1054, %v1120
        %v1153 = vadd.f32 %v1055, %v1121
        %v1154 = vadd.f32 %v1056, %v1122
        %v1155 = vadd.f32 %v1057, %v1123
        %v1156 = vadd.f32 %v1058, %v1124
        %v1157 = vperm.slane %v633, 5
        %vm1158 = vcmp.eq.s32.totalorder %v635, %v1157
        %vm1159 = vcmp.eq.s32.totalorder %v636, %v1157
        %vm1160 = vcmp.eq.s32.totalorder %v637, %v1157
        %vm1161 = vcmp.eq.s32.totalorder %v638, %v1157
        %vm1162 = vcmp.eq.s32.totalorder %v639, %v1157
        %vm1163 = vcmp.eq.s32.totalorder %v640, %v1157
        %vm1164 = vcmp.eq.s32.totalorder %v641, %v1157
        %vm1165 = vcmp.eq.s32.totalorder %v642, %v1157
        %vm1166 = vcmp.eq.s32.totalorder %v643, %v1157
        %vm1167 = vcmp.eq.s32.totalorder %v644, %v1157
        %vm1168 = vcmp.eq.s32.totalorder %v645, %v1157
        %vm1169 = vcmp.eq.s32.totalorder %v646, %v1157
        %vm1170 = vcmp.eq.s32.totalorder %v647, %v1157
        %vm1171 = vcmp.eq.s32.totalorder %v648, %v1157
        %vm1172 = vcmp.eq.s32.totalorder %v649, %v1157
        %vm1173 = vcmp.eq.s32.totalorder %v650, %v1157
        %vm1174 = vcmp.eq.s32.totalorder %v651, %v1157
        %vm1175 = vcmp.eq.s32.totalorder %v652, %v1157
        %vm1176 = vcmp.eq.s32.totalorder %v653, %v1157
        %vm1177 = vcmp.eq.s32.totalorder %v654, %v1157
        %vm1178 = vcmp.eq.s32.totalorder %v655, %v1157
        %vm1179 = vcmp.eq.s32.totalorder %v656, %v1157
        %vm1180 = vcmp.eq.s32.totalorder %v657, %v1157
        %vm1181 = vcmp.eq.s32.totalorder %v658, %v1157
        %vm1182 = vcmp.eq.s32.totalorder %v659, %v1157
        %vm1183 = vcmp.eq.s32.totalorder %v660, %v1157
        %vm1184 = vcmp.eq.s32.totalorder %v661, %v1157
        %vm1185 = vcmp.eq.s32.totalorder %v662, %v1157
        %vm1186 = vcmp.eq.s32.totalorder %v663, %v1157
        %vm1187 = vcmp.eq.s32.totalorder %v664, %v1157
        %vm1188 = vcmp.eq.s32.totalorder %v665, %v1157
        %vm1189 = vcmp.eq.s32.totalorder %v666, %v1157
        %v1190 = vperm.slane %v632, 5
        %v1191 = vsel %vm1158, %v1190, 0.0
        %v1192 = vsel %vm1159, %v1190, 0.0
        %v1193 = vsel %vm1160, %v1190, 0.0
        %v1194 = vsel %vm1161, %v1190, 0.0
        %v1195 = vsel %vm1162, %v1190, 0.0
        %v1196 = vsel %vm1163, %v1190, 0.0
        %v1197 = vsel %vm1164, %v1190, 0.0
        %v1198 = vsel %vm1165, %v1190, 0.0
        %v1199 = vsel %vm1166, %v1190, 0.0
        %v1200 = vsel %vm1167, %v1190, 0.0
        %v1201 = vsel %vm1168, %v1190, 0.0
        %v1202 = vsel %vm1169, %v1190, 0.0
        %v1203 = vsel %vm1170, %v1190, 0.0
        %v1204 = vsel %vm1171, %v1190, 0.0
        %v1205 = vsel %vm1172, %v1190, 0.0
        %v1206 = vsel %vm1173, %v1190, 0.0
        %v1207 = vsel %vm1174, %v1190, 0.0
        %v1208 = vsel %vm1175, %v1190, 0.0
        %v1209 = vsel %vm1176, %v1190, 0.0
        %v1210 = vsel %vm1177, %v1190, 0.0
        %v1211 = vsel %vm1178, %v1190, 0.0
        %v1212 = vsel %vm1179, %v1190, 0.0
        %v1213 = vsel %vm1180, %v1190, 0.0
        %v1214 = vsel %vm1181, %v1190, 0.0
        %v1215 = vsel %vm1182, %v1190, 0.0
        %v1216 = vsel %vm1183, %v1190, 0.0
        %v1217 = vsel %vm1184, %v1190, 0.0
        %v1218 = vsel %vm1185, %v1190, 0.0
        %v1219 = vsel %vm1186, %v1190, 0.0
        %v1220 = vsel %vm1187, %v1190, 0.0
        %v1221 = vsel %vm1188, %v1190, 0.0
        %v1222 = vsel %vm1189, %v1190, 0.0
        %v1223 = vadd.f32 %v1125, %v1191
        %v1224 = vadd.f32 %v1126, %v1192
        %v1225 = vadd.f32 %v1127, %v1193
        %v1226 = vadd.f32 %v1128, %v1194
        %v1227 = vadd.f32 %v1129, %v1195
        %v1228 = vadd.f32 %v1130, %v1196
        %v1229 = vadd.f32 %v1131, %v1197
        %v1230 = vadd.f32 %v1132, %v1198
        %v1231 = vadd.f32 %v1133, %v1199
        %v1232 = vadd.f32 %v1134, %v1200
        %v1233 = vadd.f32 %v1135, %v1201
        %v1234 = vadd.f32 %v1136, %v1202
        %v1235 = vadd.f32 %v1137, %v1203
        %v1236 = vadd.f32 %v1138, %v1204
        %v1237 = vadd.f32 %v1139, %v1205
        %v1238 = vadd.f32 %v1140, %v1206
        %v1239 = vadd.f32 %v1141, %v1207
        %v1240 = vadd.f32 %v1142, %v1208
        %v1241 = vadd.f32 %v1143, %v1209
        %v1242 = vadd.f32 %v1144, %v1210
        %v1243 = vadd.f32 %v1145, %v1211
        %v1244 = vadd.f32 %v1146, %v1212
        %v1245 = vadd.f32 %v1147, %v1213
        %v1246 = vadd.f32 %v1148, %v1214
        %v1247 = vadd.f32 %v1149, %v1215
        %v1248 = vadd.f32 %v1150, %v1216
        %v1249 = vadd.f32 %v1151, %v1217
        %v1250 = vadd.f32 %v1152, %v1218
        %v1251 = vadd.f32 %v1153, %v1219
        %v1252 = vadd.f32 %v1154, %v1220
        %v1253 = vadd.f32 %v1155, %v1221
        %v1254 = vadd.f32 %v1156, %v1222
        %v1255 = vperm.slane %v633, 6
        %vm1256 = vcmp.eq.s32.totalorder %v635, %v1255
        %vm1257 = vcmp.eq.s32.totalorder %v636, %v1255
        %vm1258 = vcmp.eq.s32.totalorder %v637, %v1255
        %vm1259 = vcmp.eq.s32.totalorder %v638, %v1255
        %vm1260 = vcmp.eq.s32.totalorder %v639, %v1255
        %vm1261 = vcmp.eq.s32.totalorder %v640, %v1255
        %vm1262 = vcmp.eq.s32.totalorder %v641, %v1255
        %vm1263 = vcmp.eq.s32.totalorder %v642, %v1255
        %vm1264 = vcmp.eq.s32.totalorder %v643, %v1255
        %vm1265 = vcmp.eq.s32.totalorder %v644, %v1255
        %vm1266 = vcmp.eq.s32.totalorder %v645, %v1255
        %vm1267 = vcmp.eq.s32.totalorder %v646, %v1255
        %vm1268 = vcmp.eq.s32.totalorder %v647, %v1255
        %vm1269 = vcmp.eq.s32.totalorder %v648, %v1255
        %vm1270 = vcmp.eq.s32.totalorder %v649, %v1255
        %vm1271 = vcmp.eq.s32.totalorder %v650, %v1255
        %vm1272 = vcmp.eq.s32.totalorder %v651, %v1255
        %vm1273 = vcmp.eq.s32.totalorder %v652, %v1255
        %vm1274 = vcmp.eq.s32.totalorder %v653, %v1255
        %vm1275 = vcmp.eq.s32.totalorder %v654, %v1255
        %vm1276 = vcmp.eq.s32.totalorder %v655, %v1255
        %vm1277 = vcmp.eq.s32.totalorder %v656, %v1255
        %vm1278 = vcmp.eq.s32.totalorder %v657, %v1255
        %vm1279 = vcmp.eq.s32.totalorder %v658, %v1255
        %vm1280 = vcmp.eq.s32.totalorder %v659, %v1255
        %vm1281 = vcmp.eq.s32.totalorder %v660, %v1255
        %vm1282 = vcmp.eq.s32.totalorder %v661, %v1255
        %vm1283 = vcmp.eq.s32.totalorder %v662, %v1255
        %vm1284 = vcmp.eq.s32.totalorder %v663, %v1255
        %vm1285 = vcmp.eq.s32.totalorder %v664, %v1255
        %vm1286 = vcmp.eq.s32.totalorder %v665, %v1255
        %vm1287 = vcmp.eq.s32.totalorder %v666, %v1255
        %v1288 = vperm.slane %v632, 6
        %v1289 = vsel %vm1256, %v1288, 0.0
        %v1290 = vsel %vm1257, %v1288, 0.0
        %v1291 = vsel %vm1258, %v1288, 0.0
        %v1292 = vsel %vm1259, %v1288, 0.0
        %v1293 = vsel %vm1260, %v1288, 0.0
        %v1294 = vsel %vm1261, %v1288, 0.0
        %v1295 = vsel %vm1262, %v1288, 0.0
        %v1296 = vsel %vm1263, %v1288, 0.0
        %v1297 = vsel %vm1264, %v1288, 0.0
        %v1298 = vsel %vm1265, %v1288, 0.0
        %v1299 = vsel %vm1266, %v1288, 0.0
        %v1300 = vsel %vm1267, %v1288, 0.0
        %v1301 = vsel %vm1268, %v1288, 0.0
        %v1302 = vsel %vm1269, %v1288, 0.0
        %v1303 = vsel %vm1270, %v1288, 0.0
        %v1304 = vsel %vm1271, %v1288, 0.0
        %v1305 = vsel %vm1272, %v1288, 0.0
        %v1306 = vsel %vm1273, %v1288, 0.0
        %v1307 = vsel %vm1274, %v1288, 0.0
        %v1308 = vsel %vm1275, %v1288, 0.0
        %v1309 = vsel %vm1276, %v1288, 0.0
        %v1310 = vsel %vm1277, %v1288, 0.0
        %v1311 = vsel %vm1278, %v1288, 0.0
        %v1312 = vsel %vm1279, %v1288, 0.0
        %v1313 = vsel %vm1280, %v1288, 0.0
        %v1314 = vsel %vm1281, %v1288, 0.0
        %v1315 = vsel %vm1282, %v1288, 0.0
        %v1316 = vsel %vm1283, %v1288, 0.0
        %v1317 = vsel %vm1284, %v1288, 0.0
        %v1318 = vsel %vm1285, %v1288, 0.0
        %v1319 = vsel %vm1286, %v1288, 0.0
        %v1320 = vsel %vm1287, %v1288, 0.0
        %v1321 = vadd.f32 %v1223, %v1289
        %v1322 = vadd.f32 %v1224, %v1290
        %v1323 = vadd.f32 %v1225, %v1291
        %v1324 = vadd.f32 %v1226, %v1292
        %v1325 = vadd.f32 %v1227, %v1293
        %v1326 = vadd.f32 %v1228, %v1294
        %v1327 = vadd.f32 %v1229, %v1295
        %v1328 = vadd.f32 %v1230, %v1296
        %v1329 = vadd.f32 %v1231, %v1297
        %v1330 = vadd.f32 %v1232, %v1298
        %v1331 = vadd.f32 %v1233, %v1299
        %v1332 = vadd.f32 %v1234, %v1300
        %v1333 = vadd.f32 %v1235, %v1301
        %v1334 = vadd.f32 %v1236, %v1302
        %v1335 = vadd.f32 %v1237, %v1303
        %v1336 = vadd.f32 %v1238, %v1304
        %v1337 = vadd.f32 %v1239, %v1305
        %v1338 = vadd.f32 %v1240, %v1306
        %v1339 = vadd.f32 %v1241, %v1307
        %v1340 = vadd.f32 %v1242, %v1308
        %v1341 = vadd.f32 %v1243, %v1309
        %v1342 = vadd.f32 %v1244, %v1310
        %v1343 = vadd.f32 %v1245, %v1311
        %v1344 = vadd.f32 %v1246, %v1312
        %v1345 = vadd.f32 %v1247, %v1313
        %v1346 = vadd.f32 %v1248, %v1314
        %v1347 = vadd.f32 %v1249, %v1315
        %v1348 = vadd.f32 %v1250, %v1316
        %v1349 = vadd.f32 %v1251, %v1317
        %v1350 = vadd.f32 %v1252, %v1318
        %v1351 = vadd.f32 %v1253, %v1319
        %v1352 = vadd.f32 %v1254, %v1320
        %v1353 = vperm.slane %v633, 7
        %vm1354 = vcmp.eq.s32.totalorder %v635, %v1353
        %vm1355 = vcmp.eq.s32.totalorder %v636, %v1353
        %vm1356 = vcmp.eq.s32.totalorder %v637, %v1353
        %vm1357 = vcmp.eq.s32.totalorder %v638, %v1353
        %vm1358 = vcmp.eq.s32.totalorder %v639, %v1353
        %vm1359 = vcmp.eq.s32.totalorder %v640, %v1353
        %vm1360 = vcmp.eq.s32.totalorder %v641, %v1353
        %vm1361 = vcmp.eq.s32.totalorder %v642, %v1353
        %vm1362 = vcmp.eq.s32.totalorder %v643, %v1353
        %vm1363 = vcmp.eq.s32.totalorder %v644, %v1353
        %vm1364 = vcmp.eq.s32.totalorder %v645, %v1353
        %vm1365 = vcmp.eq.s32.totalorder %v646, %v1353
        %vm1366 = vcmp.eq.s32.totalorder %v647, %v1353
        %vm1367 = vcmp.eq.s32.totalorder %v648, %v1353
        %vm1368 = vcmp.eq.s32.totalorder %v649, %v1353
        %vm1369 = vcmp.eq.s32.totalorder %v650, %v1353
        %vm1370 = vcmp.eq.s32.totalorder %v651, %v1353
        %vm1371 = vcmp.eq.s32.totalorder %v652, %v1353
        %vm1372 = vcmp.eq.s32.totalorder %v653, %v1353
        %vm1373 = vcmp.eq.s32.totalorder %v654, %v1353
        %vm1374 = vcmp.eq.s32.totalorder %v655, %v1353
        %vm1375 = vcmp.eq.s32.totalorder %v656, %v1353
        %vm1376 = vcmp.eq.s32.totalorder %v657, %v1353
        %vm1377 = vcmp.eq.s32.totalorder %v658, %v1353
        %vm1378 = vcmp.eq.s32.totalorder %v659, %v1353
        %vm1379 = vcmp.eq.s32.totalorder %v660, %v1353
        %vm1380 = vcmp.eq.s32.totalorder %v661, %v1353
        %vm1381 = vcmp.eq.s32.totalorder %v662, %v1353
        %vm1382 = vcmp.eq.s32.totalorder %v663, %v1353
        %vm1383 = vcmp.eq.s32.totalorder %v664, %v1353
        %vm1384 = vcmp.eq.s32.totalorder %v665, %v1353
        %vm1385 = vcmp.eq.s32.totalorder %v666, %v1353
        %v1386 = vperm.slane %v632, 7
        %v1387 = vsel %vm1354, %v1386, 0.0
        %v1388 = vsel %vm1355, %v1386, 0.0
        %v1389 = vsel %vm1356, %v1386, 0.0
        %v1390 = vsel %vm1357, %v1386, 0.0
        %v1391 = vsel %vm1358, %v1386, 0.0
        %v1392 = vsel %vm1359, %v1386, 0.0
        %v1393 = vsel %vm1360, %v1386, 0.0
        %v1394 = vsel %vm1361, %v1386, 0.0
        %v1395 = vsel %vm1362, %v1386, 0.0
        %v1396 = vsel %vm1363, %v1386, 0.0
        %v1397 = vsel %vm1364, %v1386, 0.0
        %v1398 = vsel %vm1365, %v1386, 0.0
        %v1399 = vsel %vm1366, %v1386, 0.0
        %v1400 = vsel %vm1367, %v1386, 0.0
        %v1401 = vsel %vm1368, %v1386, 0.0
        %v1402 = vsel %vm1369, %v1386, 0.0
        %v1403 = vsel %vm1370, %v1386, 0.0
        %v1404 = vsel %vm1371, %v1386, 0.0
        %v1405 = vsel %vm1372, %v1386, 0.0
        %v1406 = vsel %vm1373, %v1386, 0.0
        %v1407 = vsel %vm1374, %v1386, 0.0
        %v1408 = vsel %vm1375, %v1386, 0.0
        %v1409 = vsel %vm1376, %v1386, 0.0
        %v1410 = vsel %vm1377, %v1386, 0.0
        %v1411 = vsel %vm1378, %v1386, 0.0
        %v1412 = vsel %vm1379, %v1386, 0.0
        %v1413 = vsel %vm1380, %v1386, 0.0
        %v1414 = vsel %vm1381, %v1386, 0.0
        %v1415 = vsel %vm1382, %v1386, 0.0
        %v1416 = vsel %vm1383, %v1386, 0.0
        %v1417 = vsel %vm1384, %v1386, 0.0
        %v1418 = vsel %vm1385, %v1386, 0.0
        %v1419 = vadd.f32 %v1321, %v1387
        %v1420 = vadd.f32 %v1322, %v1388
        %v1421 = vadd.f32 %v1323, %v1389
        %v1422 = vadd.f32 %v1324, %v1390
        %v1423 = vadd.f32 %v1325, %v1391
        %v1424 = vadd.f32 %v1326, %v1392
        %v1425 = vadd.f32 %v1327, %v1393
        %v1426 = vadd.f32 %v1328, %v1394
        %v1427 = vadd.f32 %v1329, %v1395
        %v1428 = vadd.f32 %v1330, %v1396
        %v1429 = vadd.f32 %v1331, %v1397
        %v1430 = vadd.f32 %v1332, %v1398
        %v1431 = vadd.f32 %v1333, %v1399
        %v1432 = vadd.f32 %v1334, %v1400
        %v1433 = vadd.f32 %v1335, %v1401
        %v1434 = vadd.f32 %v1336, %v1402
        %v1435 = vadd.f32 %v1337, %v1403
        %v1436 = vadd.f32 %v1338, %v1404
        %v1437 = vadd.f32 %v1339, %v1405
        %v1438 = vadd.f32 %v1340, %v1406
        %v1439 = vadd.f32 %v1341, %v1407
        %v1440 = vadd.f32 %v1342, %v1408
        %v1441 = vadd.f32 %v1343, %v1409
        %v1442 = vadd.f32 %v1344, %v1410
        %v1443 = vadd.f32 %v1345, %v1411
        %v1444 = vadd.f32 %v1346, %v1412
        %v1445 = vadd.f32 %v1347, %v1413
        %v1446 = vadd.f32 %v1348, %v1414
        %v1447 = vadd.f32 %v1349, %v1415
        %v1448 = vadd.f32 %v1350, %v1416
        %v1449 = vadd.f32 %v1351, %v1417
        %v1450 = vadd.f32 %v1352, %v1418
        %1451 = vmatpush.xpose.msra.mxu0 %v1434
        %1452 = vmatpush.xpose.msra.mxu0 %v1433
        %1453 = vmatpush.xpose.msra.mxu0 %v1432
        %1454 = vmatpush.xpose.msra.mxu0 %v1431
        %1455 = vmatpush.xpose.msra.mxu0 %v1430
        %1456 = vmatpush.xpose.msra.mxu0 %v1429
        %1457 = vmatpush.xpose.msra.mxu0 %v1428
        %1458 = vmatpush.xpose.msra.mxu0 %v1427
        %1459 = vmatpush.xpose.msra.mxu0 %v1426
        %1460 = vmatpush.xpose.msra.mxu0 %v1425
        %1461 = vmatpush.xpose.msra.mxu0 %v1424
        %1462 = vmatpush.xpose.msra.mxu0 %v1423
        %1463 = vmatpush.xpose.msra.mxu0 %v1422
        %1464 = vmatpush.xpose.msra.mxu0 %v1421
        %1465 = vmatpush.xpose.msra.mxu0 %v1420
        %1466 = vmatpush.xpose.msra.mxu0 %v1419
        %1467 = vmatmul.f32.gmra.mxu0 %v598
        %v1468 = vpop.f32.mrf.mxu0
        %v1469 = vadd.f32 0.0, %v1468
        %1470 = vmatmul.f32.gmra.mxu0 %v601
        %v1471 = vpop.f32.mrf.mxu0
        %v1472 = vadd.f32 0.0, %v1471
        %1473 = vdwg.mxu0
        %1474 = vmatpush.xpose.msra.mxu0 %v1450
        %1475 = vmatpush.xpose.msra.mxu0 %v1449
        %1476 = vmatpush.xpose.msra.mxu0 %v1448
        %1477 = vmatpush.xpose.msra.mxu0 %v1447
        %1478 = vmatpush.xpose.msra.mxu0 %v1446
        %1479 = vmatpush.xpose.msra.mxu0 %v1445
        %1480 = vmatpush.xpose.msra.mxu0 %v1444
        %1481 = vmatpush.xpose.msra.mxu0 %v1443
        %1482 = vmatpush.xpose.msra.mxu0 %v1442
        %1483 = vmatpush.xpose.msra.mxu0 %v1441
        %1484 = vmatpush.xpose.msra.mxu0 %v1440
        %1485 = vmatpush.xpose.msra.mxu0 %v1439
        %1486 = vmatpush.xpose.msra.mxu0 %v1438
        %1487 = vmatpush.xpose.msra.mxu0 %v1437
        %1488 = vmatpush.xpose.msra.mxu0 %v1436
        %1489 = vmatpush.xpose.msra.mxu0 %v1435
        %1490 = vmatmul.f32.gmra.mxu0 %v598
        %v1491 = vpop.f32.mrf.mxu0
        %v1492 = vadd.f32 0.0, %v1491
        %1493 = vmatmul.f32.gmra.mxu0 %v601
        %v1494 = vpop.f32.mrf.mxu0
        %v1495 = vadd.f32 0.0, %v1494
        %1496 = vdwg.mxu0
        %1497 = vrot.lane.b32.xlu0 %v1469, 17
        %v1498 = vpop.permute.xlu0 %1497
        %1499 = vrot.lane.b32.xlu0 %v1472, 17
        %v1500 = vpop.permute.xlu0 %1499
        %1501 = vrot.lane.b32.xlu0 %v1492, 17
        %v1502 = vpop.permute.xlu0 %1501
        %1503 = vrot.lane.b32.xlu0 %v1495, 17
        %v1504 = vpop.permute.xlu0 %1503
        %v1505 = vlaneseq
        %v1506 = vand.u32 %v1505, 127
        %vm1507 = vcmp.lt.s32.totalorder %v1506, 17
        %v1508 = vsel %vm1507, %v1498, %v1502
        %v1509 = vsel %vm1507, %v1500, %v1504
        %v1510 = vsel %vm1507, %v1502, %v1498
        %v1511 = vsel %vm1507, %v1504, %v1500
        %1512 = vrot.lane.b32.xlu0 %v1469, 16
        %v1513 = vpop.permute.xlu0 %1512
        %1514 = vrot.lane.b32.xlu0 %v1472, 16
        %v1515 = vpop.permute.xlu0 %1514
        %1516 = vrot.lane.b32.xlu0 %v1492, 16
        %v1517 = vpop.permute.xlu0 %1516
        %1518 = vrot.lane.b32.xlu0 %v1495, 16
        %v1519 = vpop.permute.xlu0 %1518
        %vm1520 = vcmp.lt.s32.totalorder %v1506, 16
        %v1521 = vsel %vm1520, %v1513, %v1517
        %v1522 = vsel %vm1520, %v1515, %v1519
        %v1523 = vsel %vm1520, %v1517, %v1513
        %v1524 = vsel %vm1520, %v1519, %v1515
        %1525 = vrot.lane.b32.xlu0 %v1469, 15
        %v1526 = vpop.permute.xlu0 %1525
        %1527 = vrot.lane.b32.xlu0 %v1472, 15
        %v1528 = vpop.permute.xlu0 %1527
        %1529 = vrot.lane.b32.xlu0 %v1492, 15
        %v1530 = vpop.permute.xlu0 %1529
        %1531 = vrot.lane.b32.xlu0 %v1495, 15
        %v1532 = vpop.permute.xlu0 %1531
        %vm1533 = vcmp.lt.s32.totalorder %v1506, 15
        %v1534 = vsel %vm1533, %v1526, %v1530
        %v1535 = vsel %vm1533, %v1528, %v1532
        %v1536 = vsel %vm1533, %v1530, %v1526
        %v1537 = vsel %vm1533, %v1532, %v1528
        %1538 = vrot.lane.b32.xlu0 %v1469, 1
        %v1539 = vpop.permute.xlu0 %1538
        %1540 = vrot.lane.b32.xlu0 %v1472, 1
        %v1541 = vpop.permute.xlu0 %1540
        %1542 = vrot.lane.b32.xlu0 %v1492, 1
        %v1543 = vpop.permute.xlu0 %1542
        %1544 = vrot.lane.b32.xlu0 %v1495, 1
        %v1545 = vpop.permute.xlu0 %1544
        %vm1546 = vcmp.lt.s32.totalorder %v1506, 1
        %v1547 = vsel %vm1546, %v1539, %v1543
        %v1548 = vsel %vm1546, %v1541, %v1545
        %v1549 = vsel %vm1546, %v1543, %v1539
        %v1550 = vsel %vm1546, %v1545, %v1541
        %1551 = vrot.lane.b32.xlu0 %v1469, 127
        %v1552 = vpop.permute.xlu0 %1551
        %1553 = vrot.lane.b32.xlu0 %v1472, 127
        %v1554 = vpop.permute.xlu0 %1553
        %1555 = vrot.lane.b32.xlu0 %v1492, 127
        %v1556 = vpop.permute.xlu0 %1555
        %1557 = vrot.lane.b32.xlu0 %v1495, 127
        %v1558 = vpop.permute.xlu0 %1557
        %vm1559 = vcmp.lt.s32.totalorder %v1506, 127
        %v1560 = vsel %vm1559, %v1552, %v1556
        %v1561 = vsel %vm1559, %v1554, %v1558
        %v1562 = vsel %vm1559, %v1556, %v1552
        %v1563 = vsel %vm1559, %v1558, %v1554
        %1564 = vrot.lane.b32.xlu0 %v1469, 113
        %v1565 = vpop.permute.xlu0 %1564
        %1566 = vrot.lane.b32.xlu0 %v1472, 113
        %v1567 = vpop.permute.xlu0 %1566
        %1568 = vrot.lane.b32.xlu0 %v1492, 113
        %v1569 = vpop.permute.xlu0 %1568
        %1570 = vrot.lane.b32.xlu0 %v1495, 113
        %v1571 = vpop.permute.xlu0 %1570
        %vm1572 = vcmp.lt.s32.totalorder %v1506, 113
        %v1573 = vsel %vm1572, %v1565, %v1569
        %v1574 = vsel %vm1572, %v1567, %v1571
        %v1575 = vsel %vm1572, %v1569, %v1565
        %v1576 = vsel %vm1572, %v1571, %v1567
        %1577 = vrot.lane.b32.xlu0 %v1469, 112
        %v1578 = vpop.permute.xlu0 %1577
        %1579 = vrot.lane.b32.xlu0 %v1472, 112
        %v1580 = vpop.permute.xlu0 %1579
        %1581 = vrot.lane.b32.xlu0 %v1492, 112
        %v1582 = vpop.permute.xlu0 %1581
        %1583 = vrot.lane.b32.xlu0 %v1495, 112
        %v1584 = vpop.permute.xlu0 %1583
        %vm1585 = vcmp.lt.s32.totalorder %v1506, 112
        %v1586 = vsel %vm1585, %v1578, %v1582
        %v1587 = vsel %vm1585, %v1580, %v1584
        %v1588 = vsel %vm1585, %v1582, %v1578
        %v1589 = vsel %vm1585, %v1584, %v1580
        %1590 = vrot.lane.b32.xlu0 %v1469, 111
        %v1591 = vpop.permute.xlu0 %1590
        %1592 = vrot.lane.b32.xlu0 %v1472, 111
        %v1593 = vpop.permute.xlu0 %1592
        %1594 = vrot.lane.b32.xlu0 %v1492, 111
        %v1595 = vpop.permute.xlu0 %1594
        %1596 = vrot.lane.b32.xlu0 %v1495, 111
        %v1597 = vpop.permute.xlu0 %1596
        %vm1598 = vcmp.lt.s32.totalorder %v1506, 111
        %v1599 = vsel %vm1598, %v1591, %v1595
        %v1600 = vsel %vm1598, %v1593, %v1597
        %v1601 = vsel %vm1598, %v1595, %v1591
        %v1602 = vsel %vm1598, %v1597, %v1593
        %v1603 = vld [vmem:[#allocation2] sm:$0xff]
        %v1604 = vld [vmem:[#allocation2 + $0x8] sm:$0xff]
        %v1605 = vld [vmem:[#allocation2 + $0x10] sm:$0xff]
        %v1606 = vld [vmem:[#allocation2 + $0x18] sm:$0xff]
        %v1607 = vld [vmem:[#allocation2 + $0x20] sm:$0xff]
        %v1608 = vld [vmem:[#allocation2 + $0x28] sm:$0xff]
        %v1609 = vld [vmem:[#allocation2 + $0x30] sm:$0xff]
        %v1610 = vld [vmem:[#allocation2 + $0x38] sm:$0xff]
        %v1611 = vld [vmem:[#allocation2 + $0x40] sm:$0xff]
        %v1612 = vld [vmem:[#allocation2 + $0x48] sm:$0xff]
        %v1613 = vld [vmem:[#allocation2 + $0x50] sm:$0xff]
        %v1614 = vld [vmem:[#allocation2 + $0x58] sm:$0xff]
        %v1615 = vld [vmem:[#allocation2 + $0x60] sm:$0xff]
        %v1616 = vld [vmem:[#allocation2 + $0x68] sm:$0xff]
        %v1617 = vld [vmem:[#allocation2 + $0x70] sm:$0xff]
        %v1618 = vld [vmem:[#allocation2 + $0x78] sm:$0xff]
        %v1619 = vld [vmem:[#allocation2 + $0x80] sm:$0xff]
        %v1620 = vld [vmem:[#allocation2 + $0x88] sm:$0xff]
        %v1621 = vld [vmem:[#allocation2 + $0x90] sm:$0xff]
        %v1622 = vld [vmem:[#allocation2 + $0x98] sm:$0xff]
        %v1623 = vld [vmem:[#allocation2 + $0xa0] sm:$0xff]
        %v1624 = vld [vmem:[#allocation2 + $0xa8] sm:$0xff]
        %v1625 = vld [vmem:[#allocation2 + $0xb0] sm:$0xff]
        %v1626 = vld [vmem:[#allocation2 + $0xb8] sm:$0xff]
        %v1627 = vld [vmem:[#allocation2 + $0xc0] sm:$0xff]
        %v1628 = vld [vmem:[#allocation2 + $0xc8] sm:$0xff]
        %v1629 = vld [vmem:[#allocation2 + $0xd0] sm:$0xff]
        %v1630 = vld [vmem:[#allocation2 + $0xd8] sm:$0xff]
        %v1631 = vld [vmem:[#allocation2 + $0xe0] sm:$0xff]
        %v1632 = vld [vmem:[#allocation2 + $0xe8] sm:$0xff]
        %v1633 = vld [vmem:[#allocation2 + $0xf0] sm:$0xff]
        %v1634 = vld [vmem:[#allocation2 + $0xf8] sm:$0xff]
        %v1635 = vld [vmem:[#allocation2 + $0x100] sm:$0xff]
        %v1636 = vld [vmem:[#allocation2 + $0x108] sm:$0xff]
        %v1637 = vld [vmem:[#allocation2 + $0x110] sm:$0xff]
        %v1638 = vld [vmem:[#allocation2 + $0x118] sm:$0xff]
        %v1639 = vmul.f32 %v1510, %v1603
        %v1640 = vmul.f32 %v1508, %v1604
        %v1641 = vmul.f32 %v1511, %v1605
        %v1642 = vmul.f32 %v1509, %v1606
        %v1643 = vmul.f32 %v1523, %v1607
        %v1644 = vmul.f32 %v1521, %v1608
        %v1645 = vmul.f32 %v1524, %v1609
        %v1646 = vmul.f32 %v1522, %v1610
        %v1647 = vmul.f32 %v1536, %v1611
        %v1648 = vmul.f32 %v1534, %v1612
        %v1649 = vmul.f32 %v1537, %v1613
        %v1650 = vmul.f32 %v1535, %v1614
        %v1651 = vmul.f32 %v1549, %v1615
        %v1652 = vmul.f32 %v1547, %v1616
        %v1653 = vmul.f32 %v1550, %v1617
        %v1654 = vmul.f32 %v1548, %v1618
        %v1655 = vmul.f32 %v1469, %v1619
        %v1656 = vmul.f32 %v1492, %v1620
        %v1657 = vmul.f32 %v1472, %v1621
        %v1658 = vmul.f32 %v1495, %v1622
        %v1659 = vmul.f32 %v1560, %v1623
        %v1660 = vmul.f32 %v1562, %v1624
        %v1661 = vmul.f32 %v1561, %v1625
        %v1662 = vmul.f32 %v1563, %v1626
        %v1663 = vmul.f32 %v1573, %v1627
        %v1664 = vmul.f32 %v1575, %v1628
        %v1665 = vmul.f32 %v1574, %v1629
        %v1666 = vmul.f32 %v1576, %v1630
        %v1667 = vmul.f32 %v1586, %v1631
        %v1668 = vmul.f32 %v1588, %v1632
        %v1669 = vmul.f32 %v1587, %v1633
        %v1670 = vmul.f32 %v1589, %v1634
        %v1671 = vmul.f32 %v1599, %v1635
        %v1672 = vmul.f32 %v1601, %v1636
        %v1673 = vmul.f32 %v1600, %v1637
        %v1674 = vmul.f32 %v1602, %v1638
        %v1675 = vld [vmem:[%s7] sm:$0xff]
        %v1676 = vld [vmem:[%s7 + $0x8] sm:$0xff]
        %v1677 = vld [vmem:[%s7 + $0x10] sm:$0xff]
        %v1678 = vld [vmem:[%s7 + $0x18] sm:$0xff]
        %v1679 = vld [vmem:[%s7 + $0x20] sm:$0xff]
        %v1680 = vld [vmem:[%s7 + $0x28] sm:$0xff]
        %v1681 = vld [vmem:[%s7 + $0x30] sm:$0xff]
        %v1682 = vld [vmem:[%s7 + $0x38] sm:$0xff]
        %v1683 = vld [vmem:[%s8] sm:$0xff]
        %v1684 = vld [vmem:[%s8 + $0x8] sm:$0xff]
        %v1685 = vld [vmem:[%s8 + $0x10] sm:$0xff]
        %v1686 = vld [vmem:[%s8 + $0x18] sm:$0xff]
        %1688 = vset.pattern.permute.xlu0 0
        %1689 = vperm.xlu0 %1688, %v1683
        %v1690 = vpop.permute.xlu0 %1689
        %1693 = vset.pattern.permute.xlu0 0
        %1694 = vperm.xlu0 %1693, %v1684
        %v1695 = vpop.permute.xlu0 %1694
        %1698 = vset.pattern.permute.xlu0 0
        %1699 = vperm.xlu0 %1698, %v1685
        %v1700 = vpop.permute.xlu0 %1699
        %1703 = vset.pattern.permute.xlu0 0
        %1704 = vperm.xlu0 %1703, %v1686
        %v1705 = vpop.permute.xlu0 %1704
        %vm1707 = vcmask 130048
        %v1709 = vsel %vm1707, %v1676, 0
        %v1712 = vsel %vm1707, %v1678, 0
        %v1715 = vsel %vm1707, %v1680, 0
        %v1718 = vsel %vm1707, %v1682, 0
        %1720 = vmatpush.msra.mxu0 %v1669
        %1721 = vmatpush.msra.mxu0 %v1667
        %1722 = vmatpush.msra.mxu0 %v1665
        %1723 = vmatpush.msra.mxu0 %v1663
        %1724 = vmatpush.msra.mxu0 %v1661
        %1725 = vmatpush.msra.mxu0 %v1659
        %1726 = vmatpush.msra.mxu0 %v1657
        %1727 = vmatpush.msra.mxu0 %v1655
        %1728 = vmatpush.msra.mxu0 %v1653
        %1729 = vmatpush.msra.mxu0 %v1651
        %1730 = vmatpush.msra.mxu0 %v1649
        %1731 = vmatpush.msra.mxu0 %v1647
        %1732 = vmatpush.msra.mxu0 %v1645
        %1733 = vmatpush.msra.mxu0 %v1643
        %1734 = vmatpush.msra.mxu0 %v1641
        %1735 = vmatpush.msra.mxu0 %v1639
        %1736 = vmatmul.f32.gmra.mxu0 %v1675
        %v1737 = vpop.f32.mrf.mxu0
        %v1738 = vadd.f32 %v1690, %v1737
        %1739 = vmatmul.f32.gmra.mxu0 %v1677
        %v1740 = vpop.f32.mrf.mxu0
        %v1741 = vadd.f32 %v1695, %v1740
        %1742 = vmatmul.f32.gmra.mxu0 %v1679
        %v1743 = vpop.f32.mrf.mxu0
        %v1744 = vadd.f32 %v1700, %v1743
        %1745 = vmatmul.f32.gmra.mxu0 %v1681
        %v1746 = vpop.f32.mrf.mxu0
        %v1747 = vadd.f32 %v1705, %v1746
        %1748 = vdwg.mxu0
        %1749 = vmatpush.msra.mxu0 0.0
        %1750 = vmatpush.msra.mxu0 0.0
        %1751 = vmatpush.msra.mxu0 0.0
        %1752 = vmatpush.msra.mxu0 0.0
        %1753 = vmatpush.msra.mxu0 0.0
        %1754 = vmatpush.msra.mxu0 0.0
        %1755 = vmatpush.msra.mxu0 0.0
        %1756 = vmatpush.msra.mxu0 0.0
        %1757 = vmatpush.msra.mxu0 0.0
        %1758 = vmatpush.msra.mxu0 0.0
        %1759 = vmatpush.msra.mxu0 0.0
        %1760 = vmatpush.msra.mxu0 0.0
        %1761 = vmatpush.msra.mxu0 0.0
        %1762 = vmatpush.msra.mxu0 0.0
        %1763 = vmatpush.msra.mxu0 %v1673
        %1764 = vmatpush.msra.mxu0 %v1671
        %1765 = vmatmul.f32.gmra.mxu0 %v1709
        %v1766 = vpop.f32.mrf.mxu0
        %v1767 = vadd.f32 %v1738, %v1766
        %1768 = vmatmul.f32.gmra.mxu0 %v1712
        %v1769 = vpop.f32.mrf.mxu0
        %v1770 = vadd.f32 %v1741, %v1769
        %1771 = vmatmul.f32.gmra.mxu0 %v1715
        %v1772 = vpop.f32.mrf.mxu0
        %v1773 = vadd.f32 %v1744, %v1772
        %1774 = vmatmul.f32.gmra.mxu0 %v1718
        %v1775 = vpop.f32.mrf.mxu0
        %v1776 = vadd.f32 %v1747, %v1775
        %1777 = vdwg.mxu0
        %1778 = vmatpush.msra.mxu0 %v1670
        %1779 = vmatpush.msra.mxu0 %v1668
        %1780 = vmatpush.msra.mxu0 %v1666
        %1781 = vmatpush.msra.mxu0 %v1664
        %1782 = vmatpush.msra.mxu0 %v1662
        %1783 = vmatpush.msra.mxu0 %v1660
        %1784 = vmatpush.msra.mxu0 %v1658
        %1785 = vmatpush.msra.mxu0 %v1656
        %1786 = vmatpush.msra.mxu0 %v1654
        %1787 = vmatpush.msra.mxu0 %v1652
        %1788 = vmatpush.msra.mxu0 %v1650
        %1789 = vmatpush.msra.mxu0 %v1648
        %1790 = vmatpush.msra.mxu0 %v1646
        %1791 = vmatpush.msra.mxu0 %v1644
        %1792 = vmatpush.msra.mxu0 %v1642
        %1793 = vmatpush.msra.mxu0 %v1640
        %1794 = vmatmul.f32.gmra.mxu0 %v1675
        %v1795 = vpop.f32.mrf.mxu0
        %v1796 = vadd.f32 %v1690, %v1795
        %1797 = vmatmul.f32.gmra.mxu0 %v1677
        %v1798 = vpop.f32.mrf.mxu0
        %v1799 = vadd.f32 %v1695, %v1798
        %1800 = vmatmul.f32.gmra.mxu0 %v1679
        %v1801 = vpop.f32.mrf.mxu0
        %v1802 = vadd.f32 %v1700, %v1801
        %1803 = vmatmul.f32.gmra.mxu0 %v1681
        %v1804 = vpop.f32.mrf.mxu0
        %v1805 = vadd.f32 %v1705, %v1804
        %1806 = vdwg.mxu0
        %1807 = vmatpush.msra.mxu0 0.0
        %1808 = vmatpush.msra.mxu0 0.0
        %1809 = vmatpush.msra.mxu0 0.0
        %1810 = vmatpush.msra.mxu0 0.0
        %1811 = vmatpush.msra.mxu0 0.0
        %1812 = vmatpush.msra.mxu0 0.0
        %1813 = vmatpush.msra.mxu0 0.0
        %1814 = vmatpush.msra.mxu0 0.0
        %1815 = vmatpush.msra.mxu0 0.0
        %1816 = vmatpush.msra.mxu0 0.0
        %1817 = vmatpush.msra.mxu0 0.0
        %1818 = vmatpush.msra.mxu0 0.0
        %1819 = vmatpush.msra.mxu0 0.0
        %1820 = vmatpush.msra.mxu0 0.0
        %1821 = vmatpush.msra.mxu0 %v1674
        %1822 = vmatpush.msra.mxu0 %v1672
        %1823 = vmatmul.f32.gmra.mxu0 %v1709
        %v1824 = vpop.f32.mrf.mxu0
        %v1825 = vadd.f32 %v1796, %v1824
        %1826 = vmatmul.f32.gmra.mxu0 %v1712
        %v1827 = vpop.f32.mrf.mxu0
        %v1828 = vadd.f32 %v1799, %v1827
        %1829 = vmatmul.f32.gmra.mxu0 %v1715
        %v1830 = vpop.f32.mrf.mxu0
        %v1831 = vadd.f32 %v1802, %v1830
        %1832 = vmatmul.f32.gmra.mxu0 %v1718
        %v1833 = vpop.f32.mrf.mxu0
        %v1834 = vadd.f32 %v1805, %v1833
        %1835 = vdwg.mxu0
        %v1836 = vmax.f32 %v1767, 0.0
        %v1837 = vmax.f32 %v1825, 0.0
        %v1838 = vmax.f32 %v1770, 0.0
        %v1839 = vmax.f32 %v1828, 0.0
        %v1840 = vmax.f32 %v1773, 0.0
        %v1841 = vmax.f32 %v1831, 0.0
        %v1842 = vmax.f32 %v1776, 0.0
        %v1843 = vmax.f32 %v1834, 0.0
        %v1844 = vld [vmem:[%s9] sm:$0xff]
        %v1845 = vld [vmem:[%s9 + $0x8] sm:$0xff]
        %v1846 = vld [vmem:[%s9 + $0x10] sm:$0xff]
        %v1847 = vld [vmem:[%s9 + $0x18] sm:$0xff]
        %v1848 = vld [vmem:[%s10] sm:$0xff]
        %v1849 = vld [vmem:[%s10 + $0x8] sm:$0xff]
        %v1850 = vld [vmem:[%s10 + $0x10] sm:$0xff]
        %v1851 = vld [vmem:[%s10 + $0x18] sm:$0xff]
        %1853 = vset.pattern.permute.xlu0 0
        %1854 = vperm.xlu0 %1853, %v1848
        %v1855 = vpop.permute.xlu0 %1854
        %1858 = vset.pattern.permute.xlu0 0
        %1859 = vperm.xlu0 %1858, %v1849
        %v1860 = vpop.permute.xlu0 %1859
        %1863 = vset.pattern.permute.xlu0 0
        %1864 = vperm.xlu0 %1863, %v1850
        %v1865 = vpop.permute.xlu0 %1864
        %1868 = vset.pattern.permute.xlu0 0
        %1869 = vperm.xlu0 %1868, %v1851
        %v1870 = vpop.permute.xlu0 %1869
        %v1873 = vsel %vm567, %v1844, 0
        %v1876 = vsel %vm567, %v1845, 0
        %v1879 = vsel %vm567, %v1846, 0
        %v1882 = vsel %vm567, %v1847, 0
        %1884 = vmatpush.msra.mxu0 0.0
        %1885 = vmatpush.msra.mxu0 0.0
        %1886 = vmatpush.msra.mxu0 0.0
        %1887 = vmatpush.msra.mxu0 0.0
        %1888 = vmatpush.msra.mxu0 0.0
        %1889 = vmatpush.msra.mxu0 0.0
        %1890 = vmatpush.msra.mxu0 0.0
        %1891 = vmatpush.msra.mxu0 0.0
        %1892 = vmatpush.msra.mxu0 0.0
        %1893 = vmatpush.msra.mxu0 0.0
        %1894 = vmatpush.msra.mxu0 0.0
        %1895 = vmatpush.msra.mxu0 0.0
        %1896 = vmatpush.msra.mxu0 %v1842
        %1897 = vmatpush.msra.mxu0 %v1840
        %1898 = vmatpush.msra.mxu0 %v1838
        %1899 = vmatpush.msra.mxu0 %v1836
        %1900 = vmatmul.f32.gmra.mxu0 %v1873
        %v1901 = vpop.f32.mrf.mxu0
        %v1902 = vadd.f32 %v1855, %v1901
        %1903 = vmatmul.f32.gmra.mxu0 %v1876
        %v1904 = vpop.f32.mrf.mxu0
        %v1905 = vadd.f32 %v1860, %v1904
        %1906 = vmatmul.f32.gmra.mxu0 %v1879
        %v1907 = vpop.f32.mrf.mxu0
        %v1908 = vadd.f32 %v1865, %v1907
        %1909 = vmatmul.f32.gmra.mxu0 %v1882
        %v1910 = vpop.f32.mrf.mxu0
        %v1911 = vadd.f32 %v1870, %v1910
        %1912 = vdwg.mxu0
        %1913 = vmatpush.msra.mxu0 0.0
        %1914 = vmatpush.msra.mxu0 0.0
        %1915 = vmatpush.msra.mxu0 0.0
        %1916 = vmatpush.msra.mxu0 0.0
        %1917 = vmatpush.msra.mxu0 0.0
        %1918 = vmatpush.msra.mxu0 0.0
        %1919 = vmatpush.msra.mxu0 0.0
        %1920 = vmatpush.msra.mxu0 0.0
        %1921 = vmatpush.msra.mxu0 0.0
        %1922 = vmatpush.msra.mxu0 0.0
        %1923 = vmatpush.msra.mxu0 0.0
        %1924 = vmatpush.msra.mxu0 0.0
        %1925 = vmatpush.msra.mxu0 %v1843
        %1926 = vmatpush.msra.mxu0 %v1841
        %1927 = vmatpush.msra.mxu0 %v1839
        %1928 = vmatpush.msra.mxu0 %v1837
        %1929 = vmatmul.f32.gmra.mxu0 %v1873
        %v1930 = vpop.f32.mrf.mxu0
        %v1931 = vadd.f32 %v1855, %v1930
        %1932 = vmatmul.f32.gmra.mxu0 %v1876
        %v1933 = vpop.f32.mrf.mxu0
        %v1934 = vadd.f32 %v1860, %v1933
        %1935 = vmatmul.f32.gmra.mxu0 %v1879
        %v1936 = vpop.f32.mrf.mxu0
        %v1937 = vadd.f32 %v1865, %v1936
        %1938 = vmatmul.f32.gmra.mxu0 %v1882
        %v1939 = vpop.f32.mrf.mxu0
        %v1940 = vadd.f32 %v1870, %v1939
        %1941 = vdwg.mxu0
        %v1942 = vmax.f32 %v1902, 0.0
        %v1943 = vmax.f32 %v1931, 0.0
        %v1944 = vmax.f32 %v1905, 0.0
        %v1945 = vmax.f32 %v1934, 0.0
        %v1946 = vmax.f32 %v1908, 0.0
        %v1947 = vmax.f32 %v1937, 0.0
        %v1948 = vmax.f32 %v1911, 0.0
        %v1949 = vmax.f32 %v1940, 0.0
        %v1950 = vld [vmem:[%s11] sm:$0xff]
        %v1951 = vld [vmem:[%s11 + $0x8] sm:$0xff]
        %v1952 = vld [vmem:[%s12] sm:$0xff]
        %v1953 = vld [vmem:[%s12 + $0x8] sm:$0xff]
        %1955 = vset.pattern.permute.xlu0 0
        %1956 = vperm.xlu0 %1955, %v1952
        %v1957 = vpop.permute.xlu0 %1956
        %1960 = vset.pattern.permute.xlu0 0
        %1961 = vperm.xlu0 %1960, %v1953
        %v1962 = vpop.permute.xlu0 %1961
        %v1965 = vsel %vm567, %v1950, 0
        %v1968 = vsel %vm567, %v1951, 0
        %1970 = vmatpush.msra.mxu0 0.0
        %1971 = vmatpush.msra.mxu0 0.0
        %1972 = vmatpush.msra.mxu0 0.0
        %1973 = vmatpush.msra.mxu0 0.0
        %1974 = vmatpush.msra.mxu0 0.0
        %1975 = vmatpush.msra.mxu0 0.0
        %1976 = vmatpush.msra.mxu0 0.0
        %1977 = vmatpush.msra.mxu0 0.0
        %1978 = vmatpush.msra.mxu0 0.0
        %1979 = vmatpush.msra.mxu0 0.0
        %1980 = vmatpush.msra.mxu0 0.0
        %1981 = vmatpush.msra.mxu0 0.0
        %1982 = vmatpush.msra.mxu0 %v1948
        %1983 = vmatpush.msra.mxu0 %v1946
        %1984 = vmatpush.msra.mxu0 %v1944
        %1985 = vmatpush.msra.mxu0 %v1942
        %1986 = vmatmul.f32.gmra.mxu0 %v1965
        %v1987 = vpop.f32.mrf.mxu0
        %v1988 = vadd.f32 %v1957, %v1987
        %1989 = vmatmul.f32.gmra.mxu0 %v1968
        %v1990 = vpop.f32.mrf.mxu0
        %v1991 = vadd.f32 %v1962, %v1990
        %1992 = vdwg.mxu0
        %1993 = vmatpush.msra.mxu0 0.0
        %1994 = vmatpush.msra.mxu0 0.0
        %1995 = vmatpush.msra.mxu0 0.0
        %1996 = vmatpush.msra.mxu0 0.0
        %1997 = vmatpush.msra.mxu0 0.0
        %1998 = vmatpush.msra.mxu0 0.0
        %1999 = vmatpush.msra.mxu0 0.0
        %2000 = vmatpush.msra.mxu0 0.0
        %2001 = vmatpush.msra.mxu0 0.0
        %2002 = vmatpush.msra.mxu0 0.0
        %2003 = vmatpush.msra.mxu0 0.0
        %2004 = vmatpush.msra.mxu0 0.0
        %2005 = vmatpush.msra.mxu0 %v1949
        %2006 = vmatpush.msra.mxu0 %v1947
        %2007 = vmatpush.msra.mxu0 %v1945
        %2008 = vmatpush.msra.mxu0 %v1943
        %2009 = vmatmul.f32.gmra.mxu0 %v1965
        %v2010 = vpop.f32.mrf.mxu0
        %v2011 = vadd.f32 %v1957, %v2010
        %2012 = vmatmul.f32.gmra.mxu0 %v1968
        %v2013 = vpop.f32.mrf.mxu0
        %v2014 = vadd.f32 %v1962, %v2013
        %2015 = vdwg.mxu0
        %2016 = vst [vmem:[%s461] sm:$0xff] %v1988
        %2017 = vst [vmem:[%s461 + $0x8] sm:$0xff] %v2011
        %2018 = vst [vmem:[%s461 + $0x10] sm:$0xff] %v1991
        %2019 = vst [vmem:[%s461 + $0x18] sm:$0xff] %v2014
        %s2020 = sand.u32 %s319, 1
        %s2021 = scalar_lea.sflag [#allocation4], %s2020
        %s2022 = sand.u32 %s319, 1
        %s2023 = smul.addr %s2022, 32
        %s2024 = scalar_lea.vmem [#allocation5], %s2023
        // Predicated region
        $region77: #{tpu_custom_call.1} parent=71 // pred_check
          %p2025 = pneg %p329
        $region78: #{tpu_custom_call.1} parent=71 // pred_check_branch
          %2027 = sbr.rel (%p2025) target = $region80
        $region79: #{tpu_custom_call.1} parent=71 // pred_region
          %s2028 = smul.u32 2, %s28
          %2030 = vsyncadd %s2021, 0
          %s2031 = smul.addr %s2028, 8
          %s2032 = scalar_lea.hbm %s13, %s2031
          %s2033 = sshll.u32 %s2024, 4
          %s2034 = int_to_ptr.vmem [resolvable:$true] %s2033
          %s2035 = sshll.u32 %s2032, 4
          %s2036 = int_to_ptr.hbm [resolvable:$true] %s2035
          %2041 = dma.vmem_to_hbm [thread:$0]  %s2034, 512, %s2036, %s2021, 256, 512, 16
        $region80: #{tpu_custom_call.1} parent=71 // pred_fallthru
          _
      $region72: #{tpu_custom_call.1} parent=5 // pred_fallthru
        _
      %p2042 = scmp.le.s32.totalorder 2, %s23
      // Predicated region
      $region81: #{tpu_custom_call.1} parent=5 // pred_check
        %p2043 = pneg %p2042
      $region82: #{tpu_custom_call.1} parent=5 // pred_check_branch
        %2045 = sbr.rel (%p2043) target = $region84
      $region83: #{tpu_custom_call.1} parent=5 // pred_region
        %s2046 = ssub.s32 %s23, 2
        // Predicated region
        $region85: #{tpu_custom_call.1} parent=83 // pred_check
          %p2047 = pneg %p335
        $region86: #{tpu_custom_call.1} parent=83 // pred_check_branch
          %2049 = sbr.rel (%p2047) target = $region88
        $region87: #{tpu_custom_call.1} parent=83 // pred_region
          %s2050 = sand.u32 %s320, 1
          %s2051 = scalar_lea.sflag [#allocation4], %s2050
          %s2052 = sand.u32 %s320, 1
          %s2053 = smul.addr %s2052, 32
          %s2054 = scalar_lea.vmem [#allocation5], %s2053
          %2056 = dma.done %s2051, 512
        $region88: #{tpu_custom_call.1} parent=83 // pred_fallthru
          _
      $region84: #{tpu_custom_call.1} parent=5 // pred_fallthru
        _
    $region6: #{tpu_custom_call.1} parent=1 // loop_footer
      %s27 = sadd.s32 1, %s23
    $region7: #{tpu_custom_call.1} parent=1 // loop_footer_branch
      %22 = sbr.rel target = $region3
    $region8: #{tpu_custom_call.1} parent=1 // loop_exit
      _
    %2057 = vsyncpa [#allocation3], 1
    %s2058 = scalar_lea.sflag [#allocation3], 1
    %2059 = vsyncpa %s2058, 1
    %2060 = vsyncpa [#allocation4], 1
    %s2061 = scalar_lea.sflag [#allocation4], 1
    %2062 = vsyncpa %s2061, 1

</llo_original>
